<compile_context>
chip_gen: v7x
topology: tpu7x:2x2x1
jax: 0.10.0
libtpu: 0.0.40
codegen_flags: <defaults>
</compile_context>

<pallas_src>
import math

import jax
import jax.numpy as jnp
import numpy as np
from jax import lax
from jax.experimental import pallas as pl
from jax.experimental.pallas import tpu as pltpu

GRID_SIZE = 5
SPLINE_ORDER = 3
GRID_RANGE = (-1.0, 1.0)

_N_COEFF = GRID_SIZE + SPLINE_ORDER          # spline bases per input feature (8)
_N0 = GRID_SIZE + 2 * SPLINE_ORDER           # order-0 bases per feature (11)
_LANE = 128


def _round_up(v, m):
    return (v + m - 1) // m * m


# --------------------------------------------------------------------------
# Kernel
# --------------------------------------------------------------------------
def _make_kernel(knots, inv1, ninv2, in_pad, n_coeff):
    """Kernel closure; knots / reciprocal denominators are Python-float constants."""

    def kernel(xT_ref, w_ref, o_ref, feats_ref):
        # Build the feature slab once per row tile; program_id(1) sweeps output
        # tiles, which all reuse the slab held in VMEM scratch.
        @pl.when(pl.program_id(1) == 0)
        def _build_features():
            x = xT_ref[...]                                  # (in_pad, tile_n) f32, lane-dense
            # SiLU base path (mul on VPU, sigmoid on EUP).
            feats_ref[0:in_pad, :] = x * jax.nn.sigmoid(x)

            # Hoisted (x - knot_j); knots are compile-time scalars.
            xm = [x - knots[j] for j in range(_N0 + 1)]
            # Order-0 indicators kept as booleans: x in [t_j, t_{j+1})
            # (strict '<' at the upper knot, matching the PyTorch reference, so
            # x exactly at the last knot gets all-zero spline bases).
            cond = [(x >= knots[j]) & (x < knots[j + 1]) for j in range(_N0)]

            # Level 1 via selects: adjacent level-0 intervals are disjoint, so a
            # nested where reproduces left*c_j + right*c_{j+1} exactly while
            # skipping the bool->f32 casts and {0,1} mask multiplies.
            bases = [
                jnp.where(cond[j], xm[j] * inv1[0][j],
                          jnp.where(cond[j + 1], xm[j + 2] * ninv2[0][j], 0.0))
                for j in range(_N0 - 1)
            ]
            # Levels 2..K: Cox-de Boor recursion with scalar reciprocal weights
            # (divides replaced by multiplies with baked constants).
            for k in range(2, SPLINE_ORDER + 1):
                bases = [
                    xm[j] * inv1[k - 1][j] * bases[j]
                    + xm[j + k + 1] * ninv2[k - 1][j] * bases[j + 1]
                    for j in range(len(bases) - 1)
                ]
            # Write each finished basis into the slab at sublane-aligned offsets
            # (in_pad is a multiple of 8) -- no lane-axis concatenate, no extra
            # whole-tensor cast pass.
            for c in range(n_coeff):
                feats_ref[(1 + c) * in_pad:(2 + c) * in_pad, :] = bases[c]

        # Fused base + spline contraction: contract the sublane (feature) axis of
        # the slab against the fused weight; the (tile_n, tile_out) result keeps
        # rows on sublanes and the 128-padded output channels on lanes, so the
        # output stores are unmasked and lane-dense.
        o_ref[...] = lax.dot_general(
            feats_ref[...], w_ref[...],
            dimension_numbers=(((0,), (0,)), ((), ())),
            preferred_element_type=jnp.float32,
        ).astype(o_ref.dtype)

    return kernel


# --------------------------------------------------------------------------
# One-time parameter preparation (out of the per-forward path)
# --------------------------------------------------------------------------
def prepare_kan_params(base_weight, spline_weight, grid):
    """base_weight: (OUT, IN), spline_weight: (OUT, IN, G+K), grid: (IN, G+2K+1)."""
    out_features, in_features = base_weight.shape
    assert spline_weight.shape == (out_features, in_features, _N_COEFF)

    in_pad = _round_up(in_features, 8)          # sublane-aligned feature slabs
    out_pad = _round_up(out_features, _LANE)    # lane-dense output columns
    feat_dim = (1 + _N_COEFF) * in_pad

    # The module constructs the grid uniform and shared across input features;
    # bake knots and all reciprocal denominators as scalar constants.
    g = np.asarray(grid, np.float64)
    assert g.shape == (in_features, _N0 + 1)
    # TODO(synk): genuinely per-feature (non-shared) grids would need the VMEM
    # knot/reciprocal-table path (and a zero-denominator guard for repeated knots).
    assert np.allclose(g, g[:1], rtol=0.0, atol=0.0), "grid must be shared across features"
    knots = [float(v) for v in g[0]]
    inv1, ninv2 = [], []
    for k in range(1, SPLINE_ORDER + 1):
        inv1.append([1.0 / (knots[j + k] - knots[j]) for j in range(_N0 - k)])
        ninv2.append([-1.0 / (knots[j + k + 1] - knots[j + 1]) for j in range(_N0 - k)])

    # Fused weight; rows match the kernel's feature-slab layout:
    # [base over in_pad | basis_0 over in_pad | ... | basis_{G+K-1} over in_pad].
    # Zero-padded feature rows guarantee padded input columns contribute nothing.
    wb = jnp.transpose(base_weight).astype(jnp.float32)                   # (IN, OUT)
    wb = jnp.pad(wb, ((0, in_pad - in_features), (0, 0)))                 # (in_pad, OUT)
    ws = jnp.transpose(spline_weight, (2, 1, 0)).astype(jnp.float32)      # (coeff, IN, OUT)
    ws = jnp.pad(ws, ((0, 0), (0, in_pad - in_features), (0, 0)))
    ws = ws.reshape(_N_COEFF * in_pad, out_features)
    w_fused = jnp.concatenate([wb, ws], axis=0)                           # (feat_dim, OUT)
    w_fused = jnp.pad(w_fused, ((0, 0), (0, out_pad - out_features)))     # f32 MXU operand

    return dict(w_fused=w_fused, knots=knots, inv1=inv1, ninv2=ninv2,
                in_features=in_features, in_pad=in_pad,
                out_features=out_features, out_pad=out_pad,
                feat_dim=feat_dim)


# --------------------------------------------------------------------------
# VMEM / tiling heuristics (generation-aware)
# --------------------------------------------------------------------------
def _vmem_limit_bytes():
    """Explicit scoped-VMEM limit derived from the chip's physical VMEM."""
    phys = 64 * 1024 * 1024                      # conservative fallback (v7x per-core VMEM)
    try:
        info = pltpu.get_tpu_info()
        cap = getattr(info, "vmem_capacity_bytes", None)
        if cap:
            phys = int(cap)
    except Exception:
        pass
    # 96 MiB on v5e/v6e (128 MiB physical), 48 MiB on v7x (64 MiB physical).
    return min(phys * 3 // 4, 96 * 1024 * 1024)


def _pick_tile_out(out_pad, feat_dim, vmem_limit):
    """Largest output tile <= 512 lanes dividing out_pad whose double-buffered
    fused-weight block stays within ~1/3 of the VMEM budget."""
    n128 = out_pad // _LANE
    budget = vmem_limit // 3
    best = 1
    for d in range(1, min(n128, 4) + 1):
        if n128 % d == 0 and 2 * feat_dim * (d * _LANE) * 4 <= budget:
            best = d
    # TODO(synk): for very large in_features the weight block can exceed the
    # budget even at tile_out=128; that case needs an extra grid axis over the
    # fused-feature (contraction) dim with a pl.when-guarded f32 accumulator.
    return best * _LANE


# --------------------------------------------------------------------------
# Forward wrapper
# --------------------------------------------------------------------------
def kan_linear(x, params, *, max_tile_n=1024):
    """x: (..., in_features) -> (..., out_features)."""
    in_features = params["in_features"]
    in_pad = params["in_pad"]
    out_features = params["out_features"]
    out_pad = params["out_pad"]
    feat_dim = params["feat_dim"]
    assert x.shape[-1] == in_features

    original_shape = x.shape
    x2d = x.reshape(-1, in_features).astype(jnp.float32)
    n = x2d.shape[0]

    vmem_limit = _vmem_limit_bytes()
    tile_out = _pick_tile_out(out_pad, feat_dim, vmem_limit)

    # Row tile (lane axis, multiple of 128): budget the feature slab scratch,
    # ~30 live element-wise temporaries, and the double-buffered x / out blocks
    # against roughly half the scoped limit (the weight block takes the rest).
    w_bytes = 2 * feat_dim * tile_out * 4
    per_col_bytes = (feat_dim + 32 * in_pad + 2 * tile_out) * 4
    budget = max(vmem_limit // 2 - w_bytes, _LANE * per_col_bytes)
    tile_cap = max(_LANE, (budget // per_col_bytes) // _LANE * _LANE)

    n_pad128 = _round_up(max(n, 1), _LANE)
    tile_n = min(max_tile_n, tile_cap, n_pad128)
    # Give the (megacore-)parallel row axis at least two tiles when there is
    # enough work, so both v7x TensorCores get a share of the batch.
    if n_pad128 >= 2 * _LANE and n_pad128 // tile_n < 2:
        tile_n = max(_LANE, _round_up(n_pad128 // 2, _LANE))
    n_pad = _round_up(max(n, 1), tile_n)

    # Pad rows and features with zeros (padded features hit zero weight rows and
    # silu(0)=0, so they contribute nothing), then transpose so rows sit on the
    # lane axis for the element-wise spline phase.
    x2d = jnp.pad(x2d, ((0, n_pad - n), (0, in_pad - in_features)))
    xT = jnp.transpose(x2d)                                   # (in_pad, n_pad)

    grid = (n_pad // tile_n, out_pad // tile_out)

    kernel = _make_kernel(params["knots"], params["inv1"], params["ninv2"],
                          in_pad, _N_COEFF)

    # Advisory cost estimate (fused matmul + ~175 VPU ops/element + sigmoid).
    cost = pl.CostEstimate(
        flops=int(2 * n_pad * feat_dim * out_pad + 175 * n_pad * in_pad),
        transcendentals=int(n_pad * in_pad),
        bytes_accessed=int((in_pad * n_pad + feat_dim * out_pad + n_pad * out_pad) * 4),
    )

    out = pl.pallas_call(
        kernel,
        out_shape=jax.ShapeDtypeStruct((n_pad, out_pad), jnp.float32),
        grid=grid,
        in_specs=[
            pl.BlockSpec((in_pad, tile_n), lambda i, j: (0, i)),       # x^T (rows on lanes)
            pl.BlockSpec((feat_dim, tile_out), lambda i, j: (0, j)),   # fused weight
        ],
        out_specs=pl.BlockSpec((tile_n, tile_out), lambda i, j: (i, j)),
        scratch_shapes=[pltpu.VMEM((feat_dim, tile_n), jnp.float32)],  # feature slab
        compiler_params=pltpu.CompilerParams(
            dimension_semantics=("parallel", "arbitrary"),
            vmem_limit_bytes=vmem_limit),
        cost_estimate=cost,
    )(xT, params["w_fused"])

    out = out[:n, :out_features]
    return out.reshape(*original_shape[:-1], out_features)


# --------------------------------------------------------------------------
# Deterministic init mirroring KANLinear.reset_parameters()
# --------------------------------------------------------------------------
def make_params(key, in_features, out_features):
    k1, k2 = jax.random.split(key)
    # kaiming_uniform_(a=sqrt(5)) on (out, in): bound = 1 / sqrt(in_features)
    bound = 1.0 / math.sqrt(in_features)
    base_weight = jax.random.uniform(
        k1, (out_features, in_features), jnp.float32, -bound, bound)
    spline_weight = jax.random.uniform(
        k2, (out_features, in_features, _N_COEFF), jnp.float32, -0.1, 0.1)
    # buffer `grid`: arange(-K, G+K+1) * h + grid_range[0], expanded over in_features
    h = (GRID_RANGE[1] - GRID_RANGE[0]) / GRID_SIZE
    g1d = jnp.arange(-SPLINE_ORDER, GRID_SIZE + SPLINE_ORDER + 1,
                     dtype=jnp.float32) * h + GRID_RANGE[0]
    grid = jnp.broadcast_to(g1d, (in_features, g1d.shape[0]))
    return base_weight, spline_weight, grid


# --------------------------------------------------------------------------
# Pure-NumPy float64 reference mirroring the PyTorch forward exactly
# --------------------------------------------------------------------------
def kan_linear_reference(x, base_weight, spline_weight, grid):
    x = np.asarray(x, np.float64)
    base_weight = np.asarray(base_weight, np.float64)
    spline_weight = np.asarray(spline_weight, np.float64)
    grid = np.asarray(grid, np.float64)
    out_features, in_features = base_weight.shape
    original_shape = x.shape
    x2 = x.reshape(-1, in_features)
    silu = x2 / (1.0 + np.exp(-x2))
    base_out = silu @ base_weight.T
    xb = x2[:, :, None]
    bases = ((xb >= grid[:, :-1]) & (xb < grid[:, 1:])).astype(np.float64)
    for k in range(1, SPLINE_ORDER + 1):
        bases = ((xb - grid[:, : -(k + 1)])
                 / (grid[:, k:-1] - grid[:, : -(k + 1)]) * bases[:, :, :-1]
                 + (grid[:, k + 1:] - xb)
                 / (grid[:, k + 1:] - grid[:, 1:-k]) * bases[:, :, 1:])
    spline_out = bases.reshape(x2.shape[0], -1) @ spline_weight.reshape(
        out_features, -1).T
    return (base_out + spline_out).reshape(*original_shape[:-1], out_features)


if __name__ == "__main__":
    in_features = 32
    out_features = 16

    key = jax.random.PRNGKey(0)
    kx, kp = jax.random.split(key)
    base_weight, spline_weight, grid = make_params(kp, in_features, out_features)

    # One-time parameter prep (transposes / fusion / padding / scalar knot bake),
    # hoisted out of the per-forward path.
    params = prepare_kan_params(base_weight, spline_weight, grid)

    # Small input with leading batch/seq structure: (batch=2, seq=8, hidden=32).
    x = jax.random.normal(kx, (2, 8, in_features), dtype=jnp.float32) * 0.5

    out = kan_linear(x, params)
    out = jax.block_until_ready(out)

    ref = kan_linear_reference(np.asarray(x), np.asarray(base_weight),
                               np.asarray(spline_weight), np.asarray(grid))
    assert out.shape == (2, 8, out_features), out.shape
    # f32 end-to-end in the kernel; tolerance covers EUP sigmoid and MXU f32
    # accumulation-order differences vs the float64 NumPy ground truth
    # (typically ~1e-6, bounded well below 5e-3).
    np.testing.assert_allclose(np.asarray(out), ref, rtol=5e-3, atol=5e-3)

    print("KERNEL_OK")
</pallas_src>

<mosaic_0001>
module attributes {stable_mosaic.version = 11 : i64} {
  func.func @kernel(%arg0: i32, %arg1: i32, %arg2: memref<32x128xf32, #tpu.memory_space<vmem>>, %arg3: memref<288x128xf32, #tpu.memory_space<vmem>>, %arg4: memref<128x128xf32, #tpu.memory_space<vmem>>, %arg5: memref<288x128xf32, #tpu.memory_space<vmem>>) attributes {dimension_semantics = [#tpu.dimension_semantics<parallel>, #tpu.dimension_semantics<arbitrary>], iteration_bounds = array<i64: 1, 1>, scalar_prefetch = 0 : i64, scratch_operands = 1 : i64, tpu.core_type = #tpu.core_type<tc>, window_params = [{transform_indices = @transform_0, window_bounds = array<i64: 32, 128>}, {transform_indices = @transform_1, window_bounds = array<i64: 288, 128>}, {transform_indices = @transform_2, window_bounds = array<i64: 128, 128>}]} {
    %c0_i32 = arith.constant 0 : i32
    %0 = arith.cmpi eq, %arg1, %c0_i32 : i32
    %1 = arith.extui %0 : i1 to i32
    %c0_i32_0 = arith.constant 0 : i32
    %2 = arith.cmpi ne, %1, %c0_i32_0 : i32
    scf.if %2 {
      %c0_6 = arith.constant 0 : index
      %c0_7 = arith.constant 0 : index
      %7 = vector.load %arg2[%c0_6, %c0_7] : memref<32x128xf32, #tpu.memory_space<vmem>>, vector<32x128xf32>
      %8 = arith.negf %7 : vector<32x128xf32>
      %9 = math.exp %8 : vector<32x128xf32>
      %cst_8 = arith.constant 1.000000e+00 : f32
      %10 = vector.broadcast %cst_8 : f32 to vector<32x128xf32>
      %11 = arith.addf %10, %9 : vector<32x128xf32>
      %12 = arith.divf %10, %11 : vector<32x128xf32>
      %13 = arith.mulf %7, %12 : vector<32x128xf32>
      %c0_9 = arith.constant 0 : index
      %c0_10 = arith.constant 0 : index
      %14 = vector.load %arg5[%c0_9, %c0_10] : memref<288x128xf32, #tpu.memory_space<vmem>>, vector<32x128xf32>
      tpu.vector_store %arg5[%c0_9, %c0_10], %13 {strides = array<i32>} : memref<288x128xf32, #tpu.memory_space<vmem>>, vector<32x128xf32>,
      %cst_11 = arith.constant -2.200000e+00 : f32
      %15 = vector.broadcast %cst_11 : f32 to vector<32x128xf32>
      %16 = arith.subf %7, %15 : vector<32x128xf32>
      %cst_12 = arith.constant -1.800000e+00 : f32
      %17 = vector.broadcast %cst_12 : f32 to vector<32x128xf32>
      %18 = arith.subf %7, %17 : vector<32x128xf32>
      %cst_13 = arith.constant -1.400000e+00 : f32
      %19 = vector.broadcast %cst_13 : f32 to vector<32x128xf32>
      %20 = arith.subf %7, %19 : vector<32x128xf32>
      %cst_14 = arith.constant -1.000000e+00 : f32
      %21 = vector.broadcast %cst_14 : f32 to vector<32x128xf32>
      %22 = arith.subf %7, %21 : vector<32x128xf32>
      %cst_15 = arith.constant -6.000000e-01 : f32
      %23 = vector.broadcast %cst_15 : f32 to vector<32x128xf32>
      %24 = arith.subf %7, %23 : vector<32x128xf32>
      %cst_16 = arith.constant -0.199999988 : f32
      %25 = vector.broadcast %cst_16 : f32 to vector<32x128xf32>
      %26 = arith.subf %7, %25 : vector<32x128xf32>
      %cst_17 = arith.constant 0.200000048 : f32
      %27 = vector.broadcast %cst_17 : f32 to vector<32x128xf32>
      %28 = arith.subf %7, %27 : vector<32x128xf32>
      %cst_18 = arith.constant 6.000000e-01 : f32
      %29 = vector.broadcast %cst_18 : f32 to vector<32x128xf32>
      %30 = arith.subf %7, %29 : vector<32x128xf32>
      %cst_19 = arith.constant 1.000000e+00 : f32
      %31 = vector.broadcast %cst_19 : f32 to vector<32x128xf32>
      %32 = arith.subf %7, %31 : vector<32x128xf32>
      %cst_20 = arith.constant 1.4000001 : f32
      %33 = vector.broadcast %cst_20 : f32 to vector<32x128xf32>
      %34 = arith.subf %7, %33 : vector<32x128xf32>
      %cst_21 = arith.constant 1.800000e+00 : f32
      %35 = vector.broadcast %cst_21 : f32 to vector<32x128xf32>
      %36 = arith.subf %7, %35 : vector<32x128xf32>
      %cst_22 = arith.constant 2.200000e+00 : f32
      %37 = vector.broadcast %cst_22 : f32 to vector<32x128xf32>
      %38 = arith.subf %7, %37 : vector<32x128xf32>
      %cst_23 = arith.constant -2.200000e+00 : f32
      %39 = vector.broadcast %cst_23 : f32 to vector<32x128xf32>
      %40 = arith.cmpf oge, %7, %39 : vector<32x128xf32>
      %cst_24 = arith.constant -1.800000e+00 : f32
      %41 = vector.broadcast %cst_24 : f32 to vector<32x128xf32>
      %42 = arith.cmpf olt, %7, %41 : vector<32x128xf32>
      %43 = arith.andi %40, %42 : vector<32x128xi1>
      %cst_25 = arith.constant -1.800000e+00 : f32
      %44 = vector.broadcast %cst_25 : f32 to vector<32x128xf32>
      %45 = arith.cmpf oge, %7, %44 : vector<32x128xf32>
      %cst_26 = arith.constant -1.400000e+00 : f32
      %46 = vector.broadcast %cst_26 : f32 to vector<32x128xf32>
      %47 = arith.cmpf olt, %7, %46 : vector<32x128xf32>
      %48 = arith.andi %45, %47 : vector<32x128xi1>
      %cst_27 = arith.constant -1.400000e+00 : f32
      %49 = vector.broadcast %cst_27 : f32 to vector<32x128xf32>
      %50 = arith.cmpf oge, %7, %49 : vector<32x128xf32>
      %cst_28 = arith.constant -1.000000e+00 : f32
      %51 = vector.broadcast %cst_28 : f32 to vector<32x128xf32>
      %52 = arith.cmpf olt, %7, %51 : vector<32x128xf32>
      %53 = arith.andi %50, %52 : vector<32x128xi1>
      %cst_29 = arith.constant -1.000000e+00 : f32
      %54 = vector.broadcast %cst_29 : f32 to vector<32x128xf32>
      %55 = arith.cmpf oge, %7, %54 : vector<32x128xf32>
      %cst_30 = arith.constant -6.000000e-01 : f32
      %56 = vector.broadcast %cst_30 : f32 to vector<32x128xf32>
      %57 = arith.cmpf olt, %7, %56 : vector<32x128xf32>
      %58 = arith.andi %55, %57 : vector<32x128xi1>
      %cst_31 = arith.constant -6.000000e-01 : f32
      %59 = vector.broadcast %cst_31 : f32 to vector<32x128xf32>
      %60 = arith.cmpf oge, %7, %59 : vector<32x128xf32>
      %cst_32 = arith.constant -0.199999988 : f32
      %61 = vector.broadcast %cst_32 : f32 to vector<32x128xf32>
      %62 = arith.cmpf olt, %7, %61 : vector<32x128xf32>
      %63 = arith.andi %60, %62 : vector<32x128xi1>
      %cst_33 = arith.constant -0.199999988 : f32
      %64 = vector.broadcast %cst_33 : f32 to vector<32x128xf32>
      %65 = arith.cmpf oge, %7, %64 : vector<32x128xf32>
      %cst_34 = arith.constant 0.200000048 : f32
      %66 = vector.broadcast %cst_34 : f32 to vector<32x128xf32>
      %67 = arith.cmpf olt, %7, %66 : vector<32x128xf32>
      %68 = arith.andi %65, %67 : vector<32x128xi1>
      %cst_35 = arith.constant 0.200000048 : f32
      %69 = vector.broadcast %cst_35 : f32 to vector<32x128xf32>
      %70 = arith.cmpf oge, %7, %69 : vector<32x128xf32>
      %cst_36 = arith.constant 6.000000e-01 : f32
      %71 = vector.broadcast %cst_36 : f32 to vector<32x128xf32>
      %72 = arith.cmpf olt, %7, %71 : vector<32x128xf32>
      %73 = arith.andi %70, %72 : vector<32x128xi1>
      %cst_37 = arith.constant 6.000000e-01 : f32
      %74 = vector.broadcast %cst_37 : f32 to vector<32x128xf32>
      %75 = arith.cmpf oge, %7, %74 : vector<32x128xf32>
      %cst_38 = arith.constant 1.000000e+00 : f32
      %76 = vector.broadcast %cst_38 : f32 to vector<32x128xf32>
      %77 = arith.cmpf olt, %7, %76 : vector<32x128xf32>
      %78 = arith.andi %75, %77 : vector<32x128xi1>
      %cst_39 = arith.constant 1.000000e+00 : f32
      %79 = vector.broadcast %cst_39 : f32 to vector<32x128xf32>
      %80 = arith.cmpf oge, %7, %79 : vector<32x128xf32>
      %cst_40 = arith.constant 1.4000001 : f32
      %81 = vector.broadcast %cst_40 : f32 to vector<32x128xf32>
      %82 = arith.cmpf olt, %7, %81 : vector<32x128xf32>
      %83 = arith.andi %80, %82 : vector<32x128xi1>
      %cst_41 = arith.constant 1.4000001 : f32
      %84 = vector.broadcast %cst_41 : f32 to vector<32x128xf32>
      %85 = arith.cmpf oge, %7, %84 : vector<32x128xf32>
      %cst_42 = arith.constant 1.800000e+00 : f32
      %86 = vector.broadcast %cst_42 : f32 to vector<32x128xf32>
      %87 = arith.cmpf olt, %7, %86 : vector<32x128xf32>
      %88 = arith.andi %85, %87 : vector<32x128xi1>
      %cst_43 = arith.constant 1.800000e+00 : f32
      %89 = vector.broadcast %cst_43 : f32 to vector<32x128xf32>
      %90 = arith.cmpf oge, %7, %89 : vector<32x128xf32>
      %cst_44 = arith.constant 2.200000e+00 : f32
      %91 = vector.broadcast %cst_44 : f32 to vector<32x128xf32>
      %92 = arith.cmpf olt, %7, %91 : vector<32x128xf32>
      %93 = arith.andi %90, %92 : vector<32x128xi1>
      %cst_45 = arith.constant 2.49999952 : f32
      %94 = vector.broadcast %cst_45 : f32 to vector<32x128xf32>
      %95 = arith.mulf %16, %94 : vector<32x128xf32>
      %cst_46 = arith.constant -2.50000024 : f32
      %96 = vector.broadcast %cst_46 : f32 to vector<32x128xf32>
      %97 = arith.mulf %20, %96 : vector<32x128xf32>
      %cst_47 = arith.constant 0.000000e+00 : f32
      %98 = vector.broadcast %cst_47 : f32 to vector<32x128xf32>
      %99 = arith.select %48, %97, %98 : vector<32x128xi1>, vector<32x128xf32>
      %100 = arith.select %43, %95, %99 : vector<32x128xi1>, vector<32x128xf32>
      %cst_48 = arith.constant 2.50000024 : f32
      %101 = vector.broadcast %cst_48 : f32 to vector<32x128xf32>
      %102 = arith.mulf %18, %101 : vector<32x128xf32>
      %cst_49 = arith.constant -2.50000024 : f32
      %103 = vector.broadcast %cst_49 : f32 to vector<32x128xf32>
      %104 = arith.mulf %22, %103 : vector<32x128xf32>
      %cst_50 = arith.constant 0.000000e+00 : f32
      %105 = vector.broadcast %cst_50 : f32 to vector<32x128xf32>
      %106 = arith.select %53, %104, %105 : vector<32x128xi1>, vector<32x128xf32>
      %107 = arith.select %48, %102, %106 : vector<32x128xi1>, vector<32x128xf32>
      %cst_51 = arith.constant 2.50000024 : f32
      %108 = vector.broadcast %cst_51 : f32 to vector<32x128xf32>
      %109 = arith.mulf %20, %108 : vector<32x128xf32>
      %cst_52 = arith.constant -2.50000024 : f32
      %110 = vector.broadcast %cst_52 : f32 to vector<32x128xf32>
      %111 = arith.mulf %24, %110 : vector<32x128xf32>
      %cst_53 = arith.constant 0.000000e+00 : f32
      %112 = vector.broadcast %cst_53 : f32 to vector<32x128xf32>
      %113 = arith.select %58, %111, %112 : vector<32x128xi1>, vector<32x128xf32>
      %114 = arith.select %53, %109, %113 : vector<32x128xi1>, vector<32x128xf32>
      %cst_54 = arith.constant 2.50000024 : f32
      %115 = vector.broadcast %cst_54 : f32 to vector<32x128xf32>
      %116 = arith.mulf %22, %115 : vector<32x128xf32>
      %cst_55 = arith.constant -2.49999976 : f32
      %117 = vector.broadcast %cst_55 : f32 to vector<32x128xf32>
      %118 = arith.mulf %26, %117 : vector<32x128xf32>
      %cst_56 = arith.constant 0.000000e+00 : f32
      %119 = vector.broadcast %cst_56 : f32 to vector<32x128xf32>
      %120 = arith.select %63, %118, %119 : vector<32x128xi1>, vector<32x128xf32>
      %121 = arith.select %58, %116, %120 : vector<32x128xi1>, vector<32x128xf32>
      %cst_57 = arith.constant 2.49999976 : f32
      %122 = vector.broadcast %cst_57 : f32 to vector<32x128xf32>
      %123 = arith.mulf %24, %122 : vector<32x128xf32>
      %cst_58 = arith.constant -2.49999976 : f32
      %124 = vector.broadcast %cst_58 : f32 to vector<32x128xf32>
      %125 = arith.mulf %28, %124 : vector<32x128xf32>
      %cst_59 = arith.constant 0.000000e+00 : f32
      %126 = vector.broadcast %cst_59 : f32 to vector<32x128xf32>
      %127 = arith.select %68, %125, %126 : vector<32x128xi1>, vector<32x128xf32>
      %128 = arith.select %63, %123, %127 : vector<32x128xi1>, vector<32x128xf32>
      %cst_60 = arith.constant 2.49999976 : f32
      %129 = vector.broadcast %cst_60 : f32 to vector<32x128xf32>
      %130 = arith.mulf %26, %129 : vector<32x128xf32>
      %cst_61 = arith.constant -2.50000024 : f32
      %131 = vector.broadcast %cst_61 : f32 to vector<32x128xf32>
      %132 = arith.mulf %30, %131 : vector<32x128xf32>
      %cst_62 = arith.constant 0.000000e+00 : f32
      %133 = vector.broadcast %cst_62 : f32 to vector<32x128xf32>
      %134 = arith.select %73, %132, %133 : vector<32x128xi1>, vector<32x128xf32>
      %135 = arith.select %68, %130, %134 : vector<32x128xi1>, vector<32x128xf32>
      %cst_63 = arith.constant 2.50000024 : f32
      %136 = vector.broadcast %cst_63 : f32 to vector<32x128xf32>
      %137 = arith.mulf %28, %136 : vector<32x128xf32>
      %cst_64 = arith.constant -2.50000024 : f32
      %138 = vector.broadcast %cst_64 : f32 to vector<32x128xf32>
      %139 = arith.mulf %32, %138 : vector<32x128xf32>
      %cst_65 = arith.constant 0.000000e+00 : f32
      %140 = vector.broadcast %cst_65 : f32 to vector<32x128xf32>
      %141 = arith.select %78, %139, %140 : vector<32x128xi1>, vector<32x128xf32>
      %142 = arith.select %73, %137, %141 : vector<32x128xi1>, vector<32x128xf32>
      %cst_66 = arith.constant 2.50000024 : f32
      %143 = vector.broadcast %cst_66 : f32 to vector<32x128xf32>
      %144 = arith.mulf %30, %143 : vector<32x128xf32>
      %cst_67 = arith.constant -2.49999952 : f32
      %145 = vector.broadcast %cst_67 : f32 to vector<32x128xf32>
      %146 = arith.mulf %34, %145 : vector<32x128xf32>
      %cst_68 = arith.constant 0.000000e+00 : f32
      %147 = vector.broadcast %cst_68 : f32 to vector<32x128xf32>
      %148 = arith.select %83, %146, %147 : vector<32x128xi1>, vector<32x128xf32>
      %149 = arith.select %78, %144, %148 : vector<32x128xi1>, vector<32x128xf32>
      %cst_69 = arith.constant 2.49999952 : f32
      %150 = vector.broadcast %cst_69 : f32 to vector<32x128xf32>
      %151 = arith.mulf %32, %150 : vector<32x128xf32>
      %cst_70 = arith.constant -2.50000095 : f32
      %152 = vector.broadcast %cst_70 : f32 to vector<32x128xf32>
      %153 = arith.mulf %36, %152 : vector<32x128xf32>
      %cst_71 = arith.constant 0.000000e+00 : f32
      %154 = vector.broadcast %cst_71 : f32 to vector<32x128xf32>
      %155 = arith.select %88, %153, %154 : vector<32x128xi1>, vector<32x128xf32>
      %156 = arith.select %83, %151, %155 : vector<32x128xi1>, vector<32x128xf32>
      %cst_72 = arith.constant 2.50000095 : f32
      %157 = vector.broadcast %cst_72 : f32 to vector<32x128xf32>
      %158 = arith.mulf %34, %157 : vector<32x128xf32>
      %cst_73 = arith.constant -2.49999952 : f32
      %159 = vector.broadcast %cst_73 : f32 to vector<32x128xf32>
      %160 = arith.mulf %38, %159 : vector<32x128xf32>
      %cst_74 = arith.constant 0.000000e+00 : f32
      %161 = vector.broadcast %cst_74 : f32 to vector<32x128xf32>
      %162 = arith.select %93, %160, %161 : vector<32x128xi1>, vector<32x128xf32>
      %163 = arith.select %88, %158, %162 : vector<32x128xi1>, vector<32x128xf32>
      %cst_75 = arith.constant 1.24999988 : f32
      %164 = vector.broadcast %cst_75 : f32 to vector<32x128xf32>
      %165 = arith.mulf %16, %164 : vector<32x128xf32>
      %166 = arith.mulf %165, %100 : vector<32x128xf32>
      %cst_76 = arith.constant -1.25000012 : f32
      %167 = vector.broadcast %cst_76 : f32 to vector<32x128xf32>
      %168 = arith.mulf %22, %167 : vector<32x128xf32>
      %169 = arith.mulf %168, %107 : vector<32x128xf32>
      %170 = arith.addf %166, %169 : vector<32x128xf32>
      %cst_77 = arith.constant 1.25000012 : f32
      %171 = vector.broadcast %cst_77 : f32 to vector<32x128xf32>
      %172 = arith.mulf %18, %171 : vector<32x128xf32>
      %173 = arith.mulf %172, %107 : vector<32x128xf32>
      %cst_78 = arith.constant -1.25000012 : f32
      %174 = vector.broadcast %cst_78 : f32 to vector<32x128xf32>
      %175 = arith.mulf %24, %174 : vector<32x128xf32>
      %176 = arith.mulf %175, %114 : vector<32x128xf32>
      %177 = arith.addf %173, %176 : vector<32x128xf32>
      %cst_79 = arith.constant 1.25000012 : f32
      %178 = vector.broadcast %cst_79 : f32 to vector<32x128xf32>
      %179 = arith.mulf %20, %178 : vector<32x128xf32>
      %180 = arith.mulf %179, %114 : vector<32x128xf32>
      %cst_80 = arith.constant -1.250000e+00 : f32
      %181 = vector.broadcast %cst_80 : f32 to vector<32x128xf32>
      %182 = arith.mulf %26, %181 : vector<32x128xf32>
      %183 = arith.mulf %182, %121 : vector<32x128xf32>
      %184 = arith.addf %180, %183 : vector<32x128xf32>
      %cst_81 = arith.constant 1.250000e+00 : f32
      %185 = vector.broadcast %cst_81 : f32 to vector<32x128xf32>
      %186 = arith.mulf %22, %185 : vector<32x128xf32>
      %187 = arith.mulf %186, %121 : vector<32x128xf32>
      %cst_82 = arith.constant -1.24999988 : f32
      %188 = vector.broadcast %cst_82 : f32 to vector<32x128xf32>
      %189 = arith.mulf %28, %188 : vector<32x128xf32>
      %190 = arith.mulf %189, %128 : vector<32x128xf32>
      %191 = arith.addf %187, %190 : vector<32x128xf32>
      %cst_83 = arith.constant 1.24999988 : f32
      %192 = vector.broadcast %cst_83 : f32 to vector<32x128xf32>
      %193 = arith.mulf %24, %192 : vector<32x128xf32>
      %194 = arith.mulf %193, %128 : vector<32x128xf32>
      %cst_84 = arith.constant -1.250000e+00 : f32
      %195 = vector.broadcast %cst_84 : f32 to vector<32x128xf32>
      %196 = arith.mulf %30, %195 : vector<32x128xf32>
      %197 = arith.mulf %196, %135 : vector<32x128xf32>
      %198 = arith.addf %194, %197 : vector<32x128xf32>
      %cst_85 = arith.constant 1.250000e+00 : f32
      %199 = vector.broadcast %cst_85 : f32 to vector<32x128xf32>
      %200 = arith.mulf %26, %199 : vector<32x128xf32>
      %201 = arith.mulf %200, %135 : vector<32x128xf32>
      %cst_86 = arith.constant -1.25000012 : f32
      %202 = vector.broadcast %cst_86 : f32 to vector<32x128xf32>
      %203 = arith.mulf %32, %202 : vector<32x128xf32>
      %204 = arith.mulf %203, %142 : vector<32x128xf32>
      %205 = arith.addf %201, %204 : vector<32x128xf32>
      %cst_87 = arith.constant 1.25000012 : f32
      %206 = vector.broadcast %cst_87 : f32 to vector<32x128xf32>
      %207 = arith.mulf %28, %206 : vector<32x128xf32>
      %208 = arith.mulf %207, %142 : vector<32x128xf32>
      %cst_88 = arith.constant -1.24999988 : f32
      %209 = vector.broadcast %cst_88 : f32 to vector<32x128xf32>
      %210 = arith.mulf %34, %209 : vector<32x128xf32>
      %211 = arith.mulf %210, %149 : vector<32x128xf32>
      %212 = arith.addf %208, %211 : vector<32x128xf32>
      %cst_89 = arith.constant 1.24999988 : f32
      %213 = vector.broadcast %cst_89 : f32 to vector<32x128xf32>
      %214 = arith.mulf %30, %213 : vector<32x128xf32>
      %215 = arith.mulf %214, %149 : vector<32x128xf32>
      %cst_90 = arith.constant -1.25000012 : f32
      %216 = vector.broadcast %cst_90 : f32 to vector<32x128xf32>
      %217 = arith.mulf %36, %216 : vector<32x128xf32>
      %218 = arith.mulf %217, %156 : vector<32x128xf32>
      %219 = arith.addf %215, %218 : vector<32x128xf32>
      %cst_91 = arith.constant 1.25000012 : f32
      %220 = vector.broadcast %cst_91 : f32 to vector<32x128xf32>
      %221 = arith.mulf %32, %220 : vector<32x128xf32>
      %222 = arith.mulf %221, %156 : vector<32x128xf32>
      %cst_92 = arith.constant -1.25000012 : f32
      %223 = vector.broadcast %cst_92 : f32 to vector<32x128xf32>
      %224 = arith.mulf %38, %223 : vector<32x128xf32>
      %225 = arith.mulf %224, %163 : vector<32x128xf32>
      %226 = arith.addf %222, %225 : vector<32x128xf32>
      %cst_93 = arith.constant 0.833333313 : f32
      %227 = vector.broadcast %cst_93 : f32 to vector<32x128xf32>
      %228 = arith.mulf %16, %227 : vector<32x128xf32>
      %229 = arith.mulf %228, %170 : vector<32x128xf32>
      %cst_94 = arith.constant -0.833333373 : f32
      %230 = vector.broadcast %cst_94 : f32 to vector<32x128xf32>
      %231 = arith.mulf %24, %230 : vector<32x128xf32>
      %232 = arith.mulf %231, %177 : vector<32x128xf32>
      %233 = arith.addf %229, %232 : vector<32x128xf32>
      %cst_95 = arith.constant 0.833333373 : f32
      %234 = vector.broadcast %cst_95 : f32 to vector<32x128xf32>
      %235 = arith.mulf %18, %234 : vector<32x128xf32>
      %236 = arith.mulf %235, %177 : vector<32x128xf32>
      %cst_96 = arith.constant -0.833333313 : f32
      %237 = vector.broadcast %cst_96 : f32 to vector<32x128xf32>
      %238 = arith.mulf %26, %237 : vector<32x128xf32>
      %239 = arith.mulf %238, %184 : vector<32x128xf32>
      %240 = arith.addf %236, %239 : vector<32x128xf32>
      %cst_97 = arith.constant 0.833333313 : f32
      %241 = vector.broadcast %cst_97 : f32 to vector<32x128xf32>
      %242 = arith.mulf %20, %241 : vector<32x128xf32>
      %243 = arith.mulf %242, %184 : vector<32x128xf32>
      %cst_98 = arith.constant -0.833333313 : f32
      %244 = vector.broadcast %cst_98 : f32 to vector<32x128xf32>
      %245 = arith.mulf %28, %244 : vector<32x128xf32>
      %246 = arith.mulf %245, %191 : vector<32x128xf32>
      %247 = arith.addf %243, %246 : vector<32x128xf32>
      %cst_99 = arith.constant 0.833333313 : f32
      %248 = vector.broadcast %cst_99 : f32 to vector<32x128xf32>
      %249 = arith.mulf %22, %248 : vector<32x128xf32>
      %250 = arith.mulf %249, %191 : vector<32x128xf32>
      %cst_100 = arith.constant -0.833333313 : f32
      %251 = vector.broadcast %cst_100 : f32 to vector<32x128xf32>
      %252 = arith.mulf %30, %251 : vector<32x128xf32>
      %253 = arith.mulf %252, %198 : vector<32x128xf32>
      %254 = arith.addf %250, %253 : vector<32x128xf32>
      %cst_101 = arith.constant 0.833333313 : f32
      %255 = vector.broadcast %cst_101 : f32 to vector<32x128xf32>
      %256 = arith.mulf %24, %255 : vector<32x128xf32>
      %257 = arith.mulf %256, %198 : vector<32x128xf32>
      %cst_102 = arith.constant -0.833333313 : f32
      %258 = vector.broadcast %cst_102 : f32 to vector<32x128xf32>
      %259 = arith.mulf %32, %258 : vector<32x128xf32>
      %260 = arith.mulf %259, %205 : vector<32x128xf32>
      %261 = arith.addf %257, %260 : vector<32x128xf32>
      %cst_103 = arith.constant 0.833333313 : f32
      %262 = vector.broadcast %cst_103 : f32 to vector<32x128xf32>
      %263 = arith.mulf %26, %262 : vector<32x128xf32>
      %264 = arith.mulf %263, %205 : vector<32x128xf32>
      %cst_104 = arith.constant -0.833333313 : f32
      %265 = vector.broadcast %cst_104 : f32 to vector<32x128xf32>
      %266 = arith.mulf %34, %265 : vector<32x128xf32>
      %267 = arith.mulf %266, %212 : vector<32x128xf32>
      %268 = arith.addf %264, %267 : vector<32x128xf32>
      %cst_105 = arith.constant 0.833333313 : f32
      %269 = vector.broadcast %cst_105 : f32 to vector<32x128xf32>
      %270 = arith.mulf %28, %269 : vector<32x128xf32>
      %271 = arith.mulf %270, %212 : vector<32x128xf32>
      %cst_106 = arith.constant -0.833333373 : f32
      %272 = vector.broadcast %cst_106 : f32 to vector<32x128xf32>
      %273 = arith.mulf %36, %272 : vector<32x128xf32>
      %274 = arith.mulf %273, %219 : vector<32x128xf32>
      %275 = arith.addf %271, %274 : vector<32x128xf32>
      %cst_107 = arith.constant 0.833333373 : f32
      %276 = vector.broadcast %cst_107 : f32 to vector<32x128xf32>
      %277 = arith.mulf %30, %276 : vector<32x128xf32>
      %278 = arith.mulf %277, %219 : vector<32x128xf32>
      %cst_108 = arith.constant -0.833333313 : f32
      %279 = vector.broadcast %cst_108 : f32 to vector<32x128xf32>
      %280 = arith.mulf %38, %279 : vector<32x128xf32>
      %281 = arith.mulf %280, %226 : vector<32x128xf32>
      %282 = arith.addf %278, %281 : vector<32x128xf32>
      %c32 = arith.constant 32 : index
      %c0_109 = arith.constant 0 : index
      %283 = vector.load %arg5[%c32, %c0_109] : memref<288x128xf32, #tpu.memory_space<vmem>>, vector<32x128xf32>
      tpu.vector_store %arg5[%c32, %c0_109], %233 {strides = array<i32>} : memref<288x128xf32, #tpu.memory_space<vmem>>, vector<32x128xf32>,
      %c64 = arith.constant 64 : index
      %c0_110 = arith.constant 0 : index
      %284 = vector.load %arg5[%c64, %c0_110] : memref<288x128xf32, #tpu.memory_space<vmem>>, vector<32x128xf32>
      tpu.vector_store %arg5[%c64, %c0_110], %240 {strides = array<i32>} : memref<288x128xf32, #tpu.memory_space<vmem>>, vector<32x128xf32>,
      %c96 = arith.constant 96 : index
      %c0_111 = arith.constant 0 : index
      %285 = vector.load %arg5[%c96, %c0_111] : memref<288x128xf32, #tpu.memory_space<vmem>>, vector<32x128xf32>
      tpu.vector_store %arg5[%c96, %c0_111], %247 {strides = array<i32>} : memref<288x128xf32, #tpu.memory_space<vmem>>, vector<32x128xf32>,
      %c128 = arith.constant 128 : index
      %c0_112 = arith.constant 0 : index
      %286 = vector.load %arg5[%c128, %c0_112] : memref<288x128xf32, #tpu.memory_space<vmem>>, vector<32x128xf32>
      tpu.vector_store %arg5[%c128, %c0_112], %254 {strides = array<i32>} : memref<288x128xf32, #tpu.memory_space<vmem>>, vector<32x128xf32>,
      %c160 = arith.constant 160 : index
      %c0_113 = arith.constant 0 : index
      %287 = vector.load %arg5[%c160, %c0_113] : memref<288x128xf32, #tpu.memory_space<vmem>>, vector<32x128xf32>
      tpu.vector_store %arg5[%c160, %c0_113], %261 {strides = array<i32>} : memref<288x128xf32, #tpu.memory_space<vmem>>, vector<32x128xf32>,
      %c192 = arith.constant 192 : index
      %c0_114 = arith.constant 0 : index
      %288 = vector.load %arg5[%c192, %c0_114] : memref<288x128xf32, #tpu.memory_space<vmem>>, vector<32x128xf32>
      tpu.vector_store %arg5[%c192, %c0_114], %268 {strides = array<i32>} : memref<288x128xf32, #tpu.memory_space<vmem>>, vector<32x128xf32>,
      %c224 = arith.constant 224 : index
      %c0_115 = arith.constant 0 : index
      %289 = vector.load %arg5[%c224, %c0_115] : memref<288x128xf32, #tpu.memory_space<vmem>>, vector<32x128xf32>
      tpu.vector_store %arg5[%c224, %c0_115], %275 {strides = array<i32>} : memref<288x128xf32, #tpu.memory_space<vmem>>, vector<32x128xf32>,
      %c256 = arith.constant 256 : index
      %c0_116 = arith.constant 0 : index
      %290 = vector.load %arg5[%c256, %c0_116] : memref<288x128xf32, #tpu.memory_space<vmem>>, vector<32x128xf32>
      tpu.vector_store %arg5[%c256, %c0_116], %282 {strides = array<i32>} : memref<288x128xf32, #tpu.memory_space<vmem>>, vector<32x128xf32>,
    } else {
    }
    %c0 = arith.constant 0 : index
    %c0_1 = arith.constant 0 : index
    %3 = vector.load %arg5[%c0, %c0_1] : memref<288x128xf32, #tpu.memory_space<vmem>>, vector<288x128xf32>
    %c0_2 = arith.constant 0 : index
    %c0_3 = arith.constant 0 : index
    %4 = vector.load %arg3[%c0_2, %c0_3] : memref<288x128xf32, #tpu.memory_space<vmem>>, vector<288x128xf32>
    %cst = arith.constant dense<0.000000e+00> : vector<128x128xf32>
    %5 = tpu.matmul %3, %4, %cst {dimension_numbers = #tpu.dot_dimension_numbers<[0], [0], [1], [1], [0, 1, 1, 1], [], []>} : vector<288x128xf32>, vector<288x128xf32>, vector<128x128xf32> -> vector<128x128xf32>
    %c0_4 = arith.constant 0 : index
    %c0_5 = arith.constant 0 : index
    %6 = vector.load %arg4[%c0_4, %c0_5] : memref<128x128xf32, #tpu.memory_space<vmem>>, vector<128x128xf32>
    tpu.vector_store %arg4[%c0_4, %c0_5], %5 {strides = array<i32>} : memref<128x128xf32, #tpu.memory_space<vmem>>, vector<128x128xf32>,
    return
  }
  func.func @transform_0(%arg0: i32, %arg1: i32) -> (i32, i32) {
    %c0_i32 = arith.constant 0 : i32
    %c0_i32_0 = arith.constant 0 : i32
    return %c0_i32, %arg0 : i32, i32
  }
  func.func @transform_1(%arg0: i32, %arg1: i32) -> (i32, i32) {
    %c0_i32 = arith.constant 0 : i32
    %c0_i32_0 = arith.constant 0 : i32
    return %c0_i32, %arg1 : i32, i32
  }
  func.func @transform_2(%arg0: i32, %arg1: i32) -> (i32, i32) {
    %c0_i32 = arith.constant 0 : i32
    return %arg0, %arg1 : i32, i32
  }
}

</mosaic_0001>

<llo_original>
// kernel: tpu_custom_call.1
$region0: #{tpu_custom_call.1}
  #allocation0 [shape = 'u32[]', space=smem, size = 0x4, offset = 0x4, fixed_abs, tag = 'smem constant byte address 0x4 - core index']
  #allocation1 [shape = 'u32[144,128]{1,0:T(1,128)}', space=vmem, size = 0x12000, scoped, tag = 'internal scratch']
  #allocation2 [shape = 'f32[288,128]{1,0:T(8,128)}', space=vmem, size = 0x24000, scoped, tag = 'scratch operand']
  %s0 = inlined_call_operand.hbm [shape: f32[32,128], index: 0, kind: input, shape index: {}]
  %s1 = inlined_call_operand.hbm [shape: f32[288,128], index: 1, kind: input, shape index: {}]
  %s2 = inlined_call_operand.hbm [shape: f32[128,128], index: 2, kind: output, shape index: {}]
  %s3 = sld [smem:[#allocation0]]
  $region30: #{tpu_custom_call.1} parent=0
    _
  %s5 = ssub.s32 1, %s3
  %s6 = scalar_select 0, %s5, %s3
  $region1: #{tpu_custom_call.1} parent=0
    #allocation3 [shape = 'u8[16384]{0}', space=vmem, size = 0x4000, scoped, tag = 'input window, operand 0, single buffered']
    #allocation4 [shape = 's32[1]{0}', space=sflag, size = 0x4, scoped, tag = 'scoped memory for tpu_custom_call.1']
    #allocation5 [shape = 's32[1]{0}', space=sflag, size = 0x4, scoped, tag = 'scoped memory for tpu_custom_call.1']
    #allocation6 [shape = 'u8[147456]{0}', space=vmem, size = 0x24000, scoped, tag = 'input window, operand 1, single buffered']
    #allocation7 [shape = 's32[1]{0}', space=sflag, size = 0x4, scoped, tag = 'scoped memory for tpu_custom_call.1']
    #allocation8 [shape = 'u8[65536]{0}', space=vmem, size = 0x10000, scoped, tag = 'output window, operand 0, single buffered']
    %7 = vsyncpa [#allocation4], 0
    %8 = vsyncpa [#allocation7], 0
    %9 = vsyncpa [#allocation5], 0
    // Predicated region
    $region2: #{tpu_custom_call.1} parent=1 // pred_check
      _
    $region3: #{tpu_custom_call.1} parent=1 // pred_check_branch
      %11 = sbr.rel (0) target = $region5
    $region4: #{tpu_custom_call.1} parent=1 // pred_region
      %s13 = ssub.s32 512, 512
      %14 = vsyncadd [#allocation4], %s13
      %s15 = sshll.u32 [#allocation3], 4
      %s16 = int_to_ptr.vmem [resolvable:$true] %s15
      %21 = dma.hbm_to_vmem [thread:$0]  %s0, 512, %s16, [#allocation4], 128, 128, 8
    $region5: #{tpu_custom_call.1} parent=1 // pred_fallthru
      _
    // Predicated region
    $region6: #{tpu_custom_call.1} parent=1 // pred_check
      _
    $region7: #{tpu_custom_call.1} parent=1 // pred_check_branch
      %23 = sbr.rel (0) target = $region9
    $region8: #{tpu_custom_call.1} parent=1 // pred_region
      %s25 = ssub.s32 4608, 4608
      %26 = vsyncadd [#allocation7], %s25
      %s27 = sshll.u32 [#allocation6], 4
      %s28 = int_to_ptr.vmem [resolvable:$true] %s27
      %33 = dma.hbm_to_vmem [thread:$0]  %s1, 4608, %s28, [#allocation7], 128, 128, 8
    $region9: #{tpu_custom_call.1} parent=1 // pred_fallthru
      _
    // Predicated region
    $region10: #{tpu_custom_call.1} parent=1 // pred_check
      _
    $region11: #{tpu_custom_call.1} parent=1 // pred_check_branch
      %35 = sbr.rel (0) target = $region13
    $region12: #{tpu_custom_call.1} parent=1 // pred_region
      %36 = dma.done [#allocation4], 512
    $region13: #{tpu_custom_call.1} parent=1 // pred_fallthru
      _
    // Predicated region
    $region14: #{tpu_custom_call.1} parent=1 // pred_check
      _
    $region15: #{tpu_custom_call.1} parent=1 // pred_check_branch
      %38 = sbr.rel (0) target = $region17
    $region16: #{tpu_custom_call.1} parent=1 // pred_region
      %39 = dma.done [#allocation7], 4608
    $region17: #{tpu_custom_call.1} parent=1 // pred_fallthru
      _
    %p40 = scmp.eq.s32.totalorder 0, 0
    // Predicated region
    $region18: #{tpu_custom_call.1} parent=1 // pred_check
      %p41 = pneg %p40
    $region19: #{tpu_custom_call.1} parent=1 // pred_check_branch
      %43 = sbr.rel (%p41) target = $region21
    $region20: #{tpu_custom_call.1} parent=1 // pred_region
      %v44 = vld [vmem:[#allocation3] sm:$0xff]
      %v45 = vld [vmem:[#allocation3 + $0x8] sm:$0xff]
      %v46 = vld [vmem:[#allocation3 + $0x10] sm:$0xff]
      %v47 = vld [vmem:[#allocation3 + $0x18] sm:$0xff]
      %v48 = vxor.u32 %v44, 2147483648
      %v49 = vxor.u32 %v45, 2147483648
      %v50 = vxor.u32 %v46, 2147483648
      %v51 = vxor.u32 %v47, 2147483648
      %v52 = vmul.f32 %v48, 1.442695
      %v53 = vpow.pop %v52
      %v54 = vmul.f32 %v49, 1.442695
      %v55 = vpow.pop %v54
      %v56 = vmul.f32 %v50, 1.442695
      %v57 = vpow.pop %v56
      %v58 = vmul.f32 %v51, 1.442695
      %v59 = vpow.pop %v58
      %v60 = vadd.f32 %v53, 1.0
      %v61 = vadd.f32 %v55, 1.0
      %v62 = vadd.f32 %v57, 1.0
      %v63 = vadd.f32 %v59, 1.0
      %v64 = vrcp.pop %v60
      %v65 = vmul.f32 1.0, %v64
      %v66 = vrcp.pop %v61
      %v67 = vmul.f32 1.0, %v66
      %v68 = vrcp.pop %v62
      %v69 = vmul.f32 1.0, %v68
      %v70 = vrcp.pop %v63
      %v71 = vmul.f32 1.0, %v70
      %v72 = vmul.f32 %v44, %v65
      %v73 = vmul.f32 %v45, %v67
      %v74 = vmul.f32 %v46, %v69
      %v75 = vmul.f32 %v47, %v71
      %76 = vst [vmem:[#allocation2] sm:$0xff] %v72
      %77 = vst [vmem:[#allocation2 + $0x8] sm:$0xff] %v73
      %78 = vst [vmem:[#allocation2 + $0x10] sm:$0xff] %v74
      %79 = vst [vmem:[#allocation2 + $0x18] sm:$0xff] %v75
      %v80 = vsub.f32 %v44, -2.2
      %v81 = vsub.f32 %v45, -2.2
      %v82 = vsub.f32 %v46, -2.2
      %v83 = vsub.f32 %v47, -2.2
      %v84 = vsub.f32 %v44, -1.8
      %v85 = vsub.f32 %v45, -1.8
      %v86 = vsub.f32 %v46, -1.8
      %v87 = vsub.f32 %v47, -1.8
      %v88 = vsub.f32 %v44, -1.4
      %v89 = vsub.f32 %v45, -1.4
      %v90 = vsub.f32 %v46, -1.4
      %v91 = vsub.f32 %v47, -1.4
      %v92 = vsub.f32 %v44, -1.0
      %v93 = vsub.f32 %v45, -1.0
      %v94 = vsub.f32 %v46, -1.0
      %v95 = vsub.f32 %v47, -1.0
      %v96 = vsub.f32 %v44, -0.6
      %v97 = vsub.f32 %v45, -0.6
      %v98 = vsub.f32 %v46, -0.6
      %v99 = vsub.f32 %v47, -0.6
      %v100 = vsub.f32 %v44, -0.19999999
      %v101 = vsub.f32 %v45, -0.19999999
      %v102 = vsub.f32 %v46, -0.19999999
      %v103 = vsub.f32 %v47, -0.19999999
      %v104 = vsub.f32 %v44, 0.20000005
      %v105 = vsub.f32 %v45, 0.20000005
      %v106 = vsub.f32 %v46, 0.20000005
      %v107 = vsub.f32 %v47, 0.20000005
      %v108 = vsub.f32 %v44, 0.6
      %v109 = vsub.f32 %v45, 0.6
      %v110 = vsub.f32 %v46, 0.6
      %v111 = vsub.f32 %v47, 0.6
      %v112 = vsub.f32 %v44, 1.0
      %v113 = vsub.f32 %v45, 1.0
      %v114 = vsub.f32 %v46, 1.0
      %v115 = vsub.f32 %v47, 1.0
      %v116 = vsub.f32 %v44, 1.4000001
      %v117 = vsub.f32 %v45, 1.4000001
      %v118 = vsub.f32 %v46, 1.4000001
      %v119 = vsub.f32 %v47, 1.4000001
      %v120 = vsub.f32 %v44, 1.8
      %v121 = vsub.f32 %v45, 1.8
      %v122 = vsub.f32 %v46, 1.8
      %v123 = vsub.f32 %v47, 1.8
      %v124 = vsub.f32 %v44, 2.2
      %v125 = vsub.f32 %v45, 2.2
      %v126 = vsub.f32 %v46, 2.2
      %v127 = vsub.f32 %v47, 2.2
      %vm128 = vcmp.ge.f32.partialorder %v44, -2.2
      %vm129 = vcmp.ge.f32.partialorder %v45, -2.2
      %vm130 = vcmp.ge.f32.partialorder %v46, -2.2
      %vm131 = vcmp.ge.f32.partialorder %v47, -2.2
      %vm132 = vcmp.lt.f32.partialorder %v44, -1.8
      %vm133 = vcmp.lt.f32.partialorder %v45, -1.8
      %vm134 = vcmp.lt.f32.partialorder %v46, -1.8
      %vm135 = vcmp.lt.f32.partialorder %v47, -1.8
      %vm136 = vmand %vm128, %vm132
      %vm137 = vmand %vm129, %vm133
      %vm138 = vmand %vm130, %vm134
      %vm139 = vmand %vm131, %vm135
      %vm140 = vcmp.ge.f32.partialorder %v44, -1.8
      %vm141 = vcmp.ge.f32.partialorder %v45, -1.8
      %vm142 = vcmp.ge.f32.partialorder %v46, -1.8
      %vm143 = vcmp.ge.f32.partialorder %v47, -1.8
      %vm144 = vcmp.lt.f32.partialorder %v44, -1.4
      %vm145 = vcmp.lt.f32.partialorder %v45, -1.4
      %vm146 = vcmp.lt.f32.partialorder %v46, -1.4
      %vm147 = vcmp.lt.f32.partialorder %v47, -1.4
      %vm148 = vmand %vm140, %vm144
      %vm149 = vmand %vm141, %vm145
      %vm150 = vmand %vm142, %vm146
      %vm151 = vmand %vm143, %vm147
      %vm152 = vcmp.ge.f32.partialorder %v44, -1.4
      %vm153 = vcmp.ge.f32.partialorder %v45, -1.4
      %vm154 = vcmp.ge.f32.partialorder %v46, -1.4
      %vm155 = vcmp.ge.f32.partialorder %v47, -1.4
      %vm156 = vcmp.lt.f32.partialorder %v44, -1.0
      %vm157 = vcmp.lt.f32.partialorder %v45, -1.0
      %vm158 = vcmp.lt.f32.partialorder %v46, -1.0
      %vm159 = vcmp.lt.f32.partialorder %v47, -1.0
      %vm160 = vmand %vm152, %vm156
      %vm161 = vmand %vm153, %vm157
      %vm162 = vmand %vm154, %vm158
      %vm163 = vmand %vm155, %vm159
      %vm164 = vcmp.ge.f32.partialorder %v44, -1.0
      %vm165 = vcmp.ge.f32.partialorder %v45, -1.0
      %vm166 = vcmp.ge.f32.partialorder %v46, -1.0
      %vm167 = vcmp.ge.f32.partialorder %v47, -1.0
      %vm168 = vcmp.lt.f32.partialorder %v44, -0.6
      %vm169 = vcmp.lt.f32.partialorder %v45, -0.6
      %vm170 = vcmp.lt.f32.partialorder %v46, -0.6
      %vm171 = vcmp.lt.f32.partialorder %v47, -0.6
      %vm172 = vmand %vm164, %vm168
      %vm173 = vmand %vm165, %vm169
      %vm174 = vmand %vm166, %vm170
      %vm175 = vmand %vm167, %vm171
      %vm176 = vcmp.ge.f32.partialorder %v44, -0.6
      %vm177 = vcmp.ge.f32.partialorder %v45, -0.6
      %vm178 = vcmp.ge.f32.partialorder %v46, -0.6
      %vm179 = vcmp.ge.f32.partialorder %v47, -0.6
      %vm180 = vcmp.lt.f32.partialorder %v44, -0.19999999
      %vm181 = vcmp.lt.f32.partialorder %v45, -0.19999999
      %vm182 = vcmp.lt.f32.partialorder %v46, -0.19999999
      %vm183 = vcmp.lt.f32.partialorder %v47, -0.19999999
      %vm184 = vmand %vm176, %vm180
      %vm185 = vmand %vm177, %vm181
      %vm186 = vmand %vm178, %vm182
      %vm187 = vmand %vm179, %vm183
      %vm188 = vcmp.ge.f32.partialorder %v44, -0.19999999
      %vm189 = vcmp.ge.f32.partialorder %v45, -0.19999999
      %vm190 = vcmp.ge.f32.partialorder %v46, -0.19999999
      %vm191 = vcmp.ge.f32.partialorder %v47, -0.19999999
      %vm192 = vcmp.lt.f32.partialorder %v44, 0.20000005
      %vm193 = vcmp.lt.f32.partialorder %v45, 0.20000005
      %vm194 = vcmp.lt.f32.partialorder %v46, 0.20000005
      %vm195 = vcmp.lt.f32.partialorder %v47, 0.20000005
      %vm196 = vmand %vm188, %vm192
      %vm197 = vmand %vm189, %vm193
      %vm198 = vmand %vm190, %vm194
      %vm199 = vmand %vm191, %vm195
      %vm200 = vcmp.ge.f32.partialorder %v44, 0.20000005
      %vm201 = vcmp.ge.f32.partialorder %v45, 0.20000005
      %vm202 = vcmp.ge.f32.partialorder %v46, 0.20000005
      %vm203 = vcmp.ge.f32.partialorder %v47, 0.20000005
      %vm204 = vcmp.lt.f32.partialorder %v44, 0.6
      %vm205 = vcmp.lt.f32.partialorder %v45, 0.6
      %vm206 = vcmp.lt.f32.partialorder %v46, 0.6
      %vm207 = vcmp.lt.f32.partialorder %v47, 0.6
      %vm208 = vmand %vm200, %vm204
      %vm209 = vmand %vm201, %vm205
      %vm210 = vmand %vm202, %vm206
      %vm211 = vmand %vm203, %vm207
      %vm212 = vcmp.ge.f32.partialorder %v44, 0.6
      %vm213 = vcmp.ge.f32.partialorder %v45, 0.6
      %vm214 = vcmp.ge.f32.partialorder %v46, 0.6
      %vm215 = vcmp.ge.f32.partialorder %v47, 0.6
      %vm216 = vcmp.lt.f32.partialorder %v44, 1.0
      %vm217 = vcmp.lt.f32.partialorder %v45, 1.0
      %vm218 = vcmp.lt.f32.partialorder %v46, 1.0
      %vm219 = vcmp.lt.f32.partialorder %v47, 1.0
      %vm220 = vmand %vm212, %vm216
      %vm221 = vmand %vm213, %vm217
      %vm222 = vmand %vm214, %vm218
      %vm223 = vmand %vm215, %vm219
      %vm224 = vcmp.ge.f32.partialorder %v44, 1.0
      %vm225 = vcmp.ge.f32.partialorder %v45, 1.0
      %vm226 = vcmp.ge.f32.partialorder %v46, 1.0
      %vm227 = vcmp.ge.f32.partialorder %v47, 1.0
      %vm228 = vcmp.lt.f32.partialorder %v44, 1.4000001
      %vm229 = vcmp.lt.f32.partialorder %v45, 1.4000001
      %vm230 = vcmp.lt.f32.partialorder %v46, 1.4000001
      %vm231 = vcmp.lt.f32.partialorder %v47, 1.4000001
      %vm232 = vmand %vm224, %vm228
      %vm233 = vmand %vm225, %vm229
      %vm234 = vmand %vm226, %vm230
      %vm235 = vmand %vm227, %vm231
      %vm236 = vcmp.ge.f32.partialorder %v44, 1.4000001
      %vm237 = vcmp.ge.f32.partialorder %v45, 1.4000001
      %vm238 = vcmp.ge.f32.partialorder %v46, 1.4000001
      %vm239 = vcmp.ge.f32.partialorder %v47, 1.4000001
      %vm240 = vcmp.lt.f32.partialorder %v44, 1.8
      %vm241 = vcmp.lt.f32.partialorder %v45, 1.8
      %vm242 = vcmp.lt.f32.partialorder %v46, 1.8
      %vm243 = vcmp.lt.f32.partialorder %v47, 1.8
      %vm244 = vmand %vm236, %vm240
      %vm245 = vmand %vm237, %vm241
      %vm246 = vmand %vm238, %vm242
      %vm247 = vmand %vm239, %vm243
      %vm248 = vcmp.ge.f32.partialorder %v44, 1.8
      %vm249 = vcmp.ge.f32.partialorder %v45, 1.8
      %vm250 = vcmp.ge.f32.partialorder %v46, 1.8
      %vm251 = vcmp.ge.f32.partialorder %v47, 1.8
      %vm252 = vcmp.lt.f32.partialorder %v44, 2.2
      %vm253 = vcmp.lt.f32.partialorder %v45, 2.2
      %vm254 = vcmp.lt.f32.partialorder %v46, 2.2
      %vm255 = vcmp.lt.f32.partialorder %v47, 2.2
      %vm256 = vmand %vm248, %vm252
      %vm257 = vmand %vm249, %vm253
      %vm258 = vmand %vm250, %vm254
      %vm259 = vmand %vm251, %vm255
      %v260 = vmul.f32 %v80, 2.4999995
      %v261 = vmul.f32 %v81, 2.4999995
      %v262 = vmul.f32 %v82, 2.4999995
      %v263 = vmul.f32 %v83, 2.4999995
      %v264 = vmul.f32 %v88, -2.5000002
      %v265 = vmul.f32 %v89, -2.5000002
      %v266 = vmul.f32 %v90, -2.5000002
      %v267 = vmul.f32 %v91, -2.5000002
      %v268 = vsel %vm148, %v264, 0.0
      %v269 = vsel %vm149, %v265, 0.0
      %v270 = vsel %vm150, %v266, 0.0
      %v271 = vsel %vm151, %v267, 0.0
      %v272 = vsel %vm136, %v260, %v268
      %v273 = vsel %vm137, %v261, %v269
      %v274 = vsel %vm138, %v262, %v270
      %v275 = vsel %vm139, %v263, %v271
      %v276 = vmul.f32 %v84, 2.5000002
      %v277 = vmul.f32 %v85, 2.5000002
      %v278 = vmul.f32 %v86, 2.5000002
      %v279 = vmul.f32 %v87, 2.5000002
      %v280 = vmul.f32 %v92, -2.5000002
      %v281 = vmul.f32 %v93, -2.5000002
      %v282 = vmul.f32 %v94, -2.5000002
      %v283 = vmul.f32 %v95, -2.5000002
      %v284 = vsel %vm160, %v280, 0.0
      %v285 = vsel %vm161, %v281, 0.0
      %v286 = vsel %vm162, %v282, 0.0
      %v287 = vsel %vm163, %v283, 0.0
      %v288 = vsel %vm148, %v276, %v284
      %v289 = vsel %vm149, %v277, %v285
      %v290 = vsel %vm150, %v278, %v286
      %v291 = vsel %vm151, %v279, %v287
      %v292 = vmul.f32 %v88, 2.5000002
      %v293 = vmul.f32 %v89, 2.5000002
      %v294 = vmul.f32 %v90, 2.5000002
      %v295 = vmul.f32 %v91, 2.5000002
      %v296 = vmul.f32 %v96, -2.5000002
      %v297 = vmul.f32 %v97, -2.5000002
      %v298 = vmul.f32 %v98, -2.5000002
      %v299 = vmul.f32 %v99, -2.5000002
      %v300 = vsel %vm172, %v296, 0.0
      %v301 = vsel %vm173, %v297, 0.0
      %v302 = vsel %vm174, %v298, 0.0
      %v303 = vsel %vm175, %v299, 0.0
      %v304 = vsel %vm160, %v292, %v300
      %v305 = vsel %vm161, %v293, %v301
      %v306 = vsel %vm162, %v294, %v302
      %v307 = vsel %vm163, %v295, %v303
      %v308 = vmul.f32 %v92, 2.5000002
      %v309 = vmul.f32 %v93, 2.5000002
      %v310 = vmul.f32 %v94, 2.5000002
      %v311 = vmul.f32 %v95, 2.5000002
      %v312 = vmul.f32 %v100, -2.4999998
      %v313 = vmul.f32 %v101, -2.4999998
      %v314 = vmul.f32 %v102, -2.4999998
      %v315 = vmul.f32 %v103, -2.4999998
      %v316 = vsel %vm184, %v312, 0.0
      %v317 = vsel %vm185, %v313, 0.0
      %v318 = vsel %vm186, %v314, 0.0
      %v319 = vsel %vm187, %v315, 0.0
      %v320 = vsel %vm172, %v308, %v316
      %v321 = vsel %vm173, %v309, %v317
      %v322 = vsel %vm174, %v310, %v318
      %v323 = vsel %vm175, %v311, %v319
      %v324 = vmul.f32 %v96, 2.4999998
      %v325 = vmul.f32 %v97, 2.4999998
      %v326 = vmul.f32 %v98, 2.4999998
      %v327 = vmul.f32 %v99, 2.4999998
      %v328 = vmul.f32 %v104, -2.4999998
      %v329 = vmul.f32 %v105, -2.4999998
      %v330 = vmul.f32 %v106, -2.4999998
      %v331 = vmul.f32 %v107, -2.4999998
      %v332 = vsel %vm196, %v328, 0.0
      %v333 = vsel %vm197, %v329, 0.0
      %v334 = vsel %vm198, %v330, 0.0
      %v335 = vsel %vm199, %v331, 0.0
      %v336 = vsel %vm184, %v324, %v332
      %v337 = vsel %vm185, %v325, %v333
      %v338 = vsel %vm186, %v326, %v334
      %v339 = vsel %vm187, %v327, %v335
      %v340 = vmul.f32 %v100, 2.4999998
      %v341 = vmul.f32 %v101, 2.4999998
      %v342 = vmul.f32 %v102, 2.4999998
      %v343 = vmul.f32 %v103, 2.4999998
      %v344 = vmul.f32 %v108, -2.5000002
      %v345 = vmul.f32 %v109, -2.5000002
      %v346 = vmul.f32 %v110, -2.5000002
      %v347 = vmul.f32 %v111, -2.5000002
      %v348 = vsel %vm208, %v344, 0.0
      %v349 = vsel %vm209, %v345, 0.0
      %v350 = vsel %vm210, %v346, 0.0
      %v351 = vsel %vm211, %v347, 0.0
      %v352 = vsel %vm196, %v340, %v348
      %v353 = vsel %vm197, %v341, %v349
      %v354 = vsel %vm198, %v342, %v350
      %v355 = vsel %vm199, %v343, %v351
      %v356 = vmul.f32 %v104, 2.5000002
      %v357 = vmul.f32 %v105, 2.5000002
      %v358 = vmul.f32 %v106, 2.5000002
      %v359 = vmul.f32 %v107, 2.5000002
      %v360 = vmul.f32 %v112, -2.5000002
      %v361 = vmul.f32 %v113, -2.5000002
      %v362 = vmul.f32 %v114, -2.5000002
      %v363 = vmul.f32 %v115, -2.5000002
      %v364 = vsel %vm220, %v360, 0.0
      %v365 = vsel %vm221, %v361, 0.0
      %v366 = vsel %vm222, %v362, 0.0
      %v367 = vsel %vm223, %v363, 0.0
      %v368 = vsel %vm208, %v356, %v364
      %v369 = vsel %vm209, %v357, %v365
      %v370 = vsel %vm210, %v358, %v366
      %v371 = vsel %vm211, %v359, %v367
      %v372 = vmul.f32 %v108, 2.5000002
      %v373 = vmul.f32 %v109, 2.5000002
      %v374 = vmul.f32 %v110, 2.5000002
      %v375 = vmul.f32 %v111, 2.5000002
      %v376 = vmul.f32 %v116, -2.4999995
      %v377 = vmul.f32 %v117, -2.4999995
      %v378 = vmul.f32 %v118, -2.4999995
      %v379 = vmul.f32 %v119, -2.4999995
      %v380 = vsel %vm232, %v376, 0.0
      %v381 = vsel %vm233, %v377, 0.0
      %v382 = vsel %vm234, %v378, 0.0
      %v383 = vsel %vm235, %v379, 0.0
      %v384 = vsel %vm220, %v372, %v380
      %v385 = vsel %vm221, %v373, %v381
      %v386 = vsel %vm222, %v374, %v382
      %v387 = vsel %vm223, %v375, %v383
      %v388 = vmul.f32 %v112, 2.4999995
      %v389 = vmul.f32 %v113, 2.4999995
      %v390 = vmul.f32 %v114, 2.4999995
      %v391 = vmul.f32 %v115, 2.4999995
      %v392 = vmul.f32 %v120, -2.500001
      %v393 = vmul.f32 %v121, -2.500001
      %v394 = vmul.f32 %v122, -2.500001
      %v395 = vmul.f32 %v123, -2.500001
      %v396 = vsel %vm244, %v392, 0.0
      %v397 = vsel %vm245, %v393, 0.0
      %v398 = vsel %vm246, %v394, 0.0
      %v399 = vsel %vm247, %v395, 0.0
      %v400 = vsel %vm232, %v388, %v396
      %v401 = vsel %vm233, %v389, %v397
      %v402 = vsel %vm234, %v390, %v398
      %v403 = vsel %vm235, %v391, %v399
      %v404 = vmul.f32 %v116, 2.500001
      %v405 = vmul.f32 %v117, 2.500001
      %v406 = vmul.f32 %v118, 2.500001
      %v407 = vmul.f32 %v119, 2.500001
      %v408 = vmul.f32 %v124, -2.4999995
      %v409 = vmul.f32 %v125, -2.4999995
      %v410 = vmul.f32 %v126, -2.4999995
      %v411 = vmul.f32 %v127, -2.4999995
      %v412 = vsel %vm256, %v408, 0.0
      %v413 = vsel %vm257, %v409, 0.0
      %v414 = vsel %vm258, %v410, 0.0
      %v415 = vsel %vm259, %v411, 0.0
      %v416 = vsel %vm244, %v404, %v412
      %v417 = vsel %vm245, %v405, %v413
      %v418 = vsel %vm246, %v406, %v414
      %v419 = vsel %vm247, %v407, %v415
      %v420 = vmul.f32 %v80, 1.2499999
      %v421 = vmul.f32 %v81, 1.2499999
      %v422 = vmul.f32 %v82, 1.2499999
      %v423 = vmul.f32 %v83, 1.2499999
      %v424 = vmul.f32 %v420, %v272
      %v425 = vmul.f32 %v421, %v273
      %v426 = vmul.f32 %v422, %v274
      %v427 = vmul.f32 %v423, %v275
      %v428 = vmul.f32 %v92, -1.2500001
      %v429 = vmul.f32 %v93, -1.2500001
      %v430 = vmul.f32 %v94, -1.2500001
      %v431 = vmul.f32 %v95, -1.2500001
      %v432 = vmul.f32 %v428, %v288
      %v433 = vmul.f32 %v429, %v289
      %v434 = vmul.f32 %v430, %v290
      %v435 = vmul.f32 %v431, %v291
      %v436 = vadd.f32 %v424, %v432
      %v437 = vadd.f32 %v425, %v433
      %v438 = vadd.f32 %v426, %v434
      %v439 = vadd.f32 %v427, %v435
      %v440 = vmul.f32 %v84, 1.2500001
      %v441 = vmul.f32 %v85, 1.2500001
      %v442 = vmul.f32 %v86, 1.2500001
      %v443 = vmul.f32 %v87, 1.2500001
      %v444 = vmul.f32 %v440, %v288
      %v445 = vmul.f32 %v441, %v289
      %v446 = vmul.f32 %v442, %v290
      %v447 = vmul.f32 %v443, %v291
      %v448 = vmul.f32 %v96, -1.2500001
      %v449 = vmul.f32 %v97, -1.2500001
      %v450 = vmul.f32 %v98, -1.2500001
      %v451 = vmul.f32 %v99, -1.2500001
      %v452 = vmul.f32 %v448, %v304
      %v453 = vmul.f32 %v449, %v305
      %v454 = vmul.f32 %v450, %v306
      %v455 = vmul.f32 %v451, %v307
      %v456 = vadd.f32 %v444, %v452
      %v457 = vadd.f32 %v445, %v453
      %v458 = vadd.f32 %v446, %v454
      %v459 = vadd.f32 %v447, %v455
      %v460 = vmul.f32 %v88, 1.2500001
      %v461 = vmul.f32 %v89, 1.2500001
      %v462 = vmul.f32 %v90, 1.2500001
      %v463 = vmul.f32 %v91, 1.2500001
      %v464 = vmul.f32 %v460, %v304
      %v465 = vmul.f32 %v461, %v305
      %v466 = vmul.f32 %v462, %v306
      %v467 = vmul.f32 %v463, %v307
      %v468 = vmul.f32 %v100, -1.25
      %v469 = vmul.f32 %v101, -1.25
      %v470 = vmul.f32 %v102, -1.25
      %v471 = vmul.f32 %v103, -1.25
      %v472 = vmul.f32 %v468, %v320
      %v473 = vmul.f32 %v469, %v321
      %v474 = vmul.f32 %v470, %v322
      %v475 = vmul.f32 %v471, %v323
      %v476 = vadd.f32 %v464, %v472
      %v477 = vadd.f32 %v465, %v473
      %v478 = vadd.f32 %v466, %v474
      %v479 = vadd.f32 %v467, %v475
      %v480 = vmul.f32 %v92, 1.25
      %v481 = vmul.f32 %v93, 1.25
      %v482 = vmul.f32 %v94, 1.25
      %v483 = vmul.f32 %v95, 1.25
      %v484 = vmul.f32 %v480, %v320
      %v485 = vmul.f32 %v481, %v321
      %v486 = vmul.f32 %v482, %v322
      %v487 = vmul.f32 %v483, %v323
      %v488 = vmul.f32 %v104, -1.2499999
      %v489 = vmul.f32 %v105, -1.2499999
      %v490 = vmul.f32 %v106, -1.2499999
      %v491 = vmul.f32 %v107, -1.2499999
      %v492 = vmul.f32 %v488, %v336
      %v493 = vmul.f32 %v489, %v337
      %v494 = vmul.f32 %v490, %v338
      %v495 = vmul.f32 %v491, %v339
      %v496 = vadd.f32 %v484, %v492
      %v497 = vadd.f32 %v485, %v493
      %v498 = vadd.f32 %v486, %v494
      %v499 = vadd.f32 %v487, %v495
      %v500 = vmul.f32 %v96, 1.2499999
      %v501 = vmul.f32 %v97, 1.2499999
      %v502 = vmul.f32 %v98, 1.2499999
      %v503 = vmul.f32 %v99, 1.2499999
      %v504 = vmul.f32 %v500, %v336
      %v505 = vmul.f32 %v501, %v337
      %v506 = vmul.f32 %v502, %v338
      %v507 = vmul.f32 %v503, %v339
      %v508 = vmul.f32 %v108, -1.25
      %v509 = vmul.f32 %v109, -1.25
      %v510 = vmul.f32 %v110, -1.25
      %v511 = vmul.f32 %v111, -1.25
      %v512 = vmul.f32 %v508, %v352
      %v513 = vmul.f32 %v509, %v353
      %v514 = vmul.f32 %v510, %v354
      %v515 = vmul.f32 %v511, %v355
      %v516 = vadd.f32 %v504, %v512
      %v517 = vadd.f32 %v505, %v513
      %v518 = vadd.f32 %v506, %v514
      %v519 = vadd.f32 %v507, %v515
      %v520 = vmul.f32 %v100, 1.25
      %v521 = vmul.f32 %v101, 1.25
      %v522 = vmul.f32 %v102, 1.25
      %v523 = vmul.f32 %v103, 1.25
      %v524 = vmul.f32 %v520, %v352
      %v525 = vmul.f32 %v521, %v353
      %v526 = vmul.f32 %v522, %v354
      %v527 = vmul.f32 %v523, %v355
      %v528 = vmul.f32 %v112, -1.2500001
      %v529 = vmul.f32 %v113, -1.2500001
      %v530 = vmul.f32 %v114, -1.2500001
      %v531 = vmul.f32 %v115, -1.2500001
      %v532 = vmul.f32 %v528, %v368
      %v533 = vmul.f32 %v529, %v369
      %v534 = vmul.f32 %v530, %v370
      %v535 = vmul.f32 %v531, %v371
      %v536 = vadd.f32 %v524, %v532
      %v537 = vadd.f32 %v525, %v533
      %v538 = vadd.f32 %v526, %v534
      %v539 = vadd.f32 %v527, %v535
      %v540 = vmul.f32 %v104, 1.2500001
      %v541 = vmul.f32 %v105, 1.2500001
      %v542 = vmul.f32 %v106, 1.2500001
      %v543 = vmul.f32 %v107, 1.2500001
      %v544 = vmul.f32 %v540, %v368
      %v545 = vmul.f32 %v541, %v369
      %v546 = vmul.f32 %v542, %v370
      %v547 = vmul.f32 %v543, %v371
      %v548 = vmul.f32 %v116, -1.2499999
      %v549 = vmul.f32 %v117, -1.2499999
      %v550 = vmul.f32 %v118, -1.2499999
      %v551 = vmul.f32 %v119, -1.2499999
      %v552 = vmul.f32 %v548, %v384
      %v553 = vmul.f32 %v549, %v385
      %v554 = vmul.f32 %v550, %v386
      %v555 = vmul.f32 %v551, %v387
      %v556 = vadd.f32 %v544, %v552
      %v557 = vadd.f32 %v545, %v553
      %v558 = vadd.f32 %v546, %v554
      %v559 = vadd.f32 %v547, %v555
      %v560 = vmul.f32 %v108, 1.2499999
      %v561 = vmul.f32 %v109, 1.2499999
      %v562 = vmul.f32 %v110, 1.2499999
      %v563 = vmul.f32 %v111, 1.2499999
      %v564 = vmul.f32 %v560, %v384
      %v565 = vmul.f32 %v561, %v385
      %v566 = vmul.f32 %v562, %v386
      %v567 = vmul.f32 %v563, %v387
      %v568 = vmul.f32 %v120, -1.2500001
      %v569 = vmul.f32 %v121, -1.2500001
      %v570 = vmul.f32 %v122, -1.2500001
      %v571 = vmul.f32 %v123, -1.2500001
      %v572 = vmul.f32 %v568, %v400
      %v573 = vmul.f32 %v569, %v401
      %v574 = vmul.f32 %v570, %v402
      %v575 = vmul.f32 %v571, %v403
      %v576 = vadd.f32 %v564, %v572
      %v577 = vadd.f32 %v565, %v573
      %v578 = vadd.f32 %v566, %v574
      %v579 = vadd.f32 %v567, %v575
      %v580 = vmul.f32 %v112, 1.2500001
      %v581 = vmul.f32 %v113, 1.2500001
      %v582 = vmul.f32 %v114, 1.2500001
      %v583 = vmul.f32 %v115, 1.2500001
      %v584 = vmul.f32 %v580, %v400
      %v585 = vmul.f32 %v581, %v401
      %v586 = vmul.f32 %v582, %v402
      %v587 = vmul.f32 %v583, %v403
      %v588 = vmul.f32 %v124, -1.2500001
      %v589 = vmul.f32 %v125, -1.2500001
      %v590 = vmul.f32 %v126, -1.2500001
      %v591 = vmul.f32 %v127, -1.2500001
      %v592 = vmul.f32 %v588, %v416
      %v593 = vmul.f32 %v589, %v417
      %v594 = vmul.f32 %v590, %v418
      %v595 = vmul.f32 %v591, %v419
      %v596 = vadd.f32 %v584, %v592
      %v597 = vadd.f32 %v585, %v593
      %v598 = vadd.f32 %v586, %v594
      %v599 = vadd.f32 %v587, %v595
      %v600 = vmul.f32 %v80, 0.8333333
      %v601 = vmul.f32 %v81, 0.8333333
      %v602 = vmul.f32 %v82, 0.8333333
      %v603 = vmul.f32 %v83, 0.8333333
      %v604 = vmul.f32 %v600, %v436
      %v605 = vmul.f32 %v601, %v437
      %v606 = vmul.f32 %v602, %v438
      %v607 = vmul.f32 %v603, %v439
      %v608 = vmul.f32 %v96, -0.8333334
      %v609 = vmul.f32 %v97, -0.8333334
      %v610 = vmul.f32 %v98, -0.8333334
      %v611 = vmul.f32 %v99, -0.8333334
      %v612 = vmul.f32 %v608, %v456
      %v613 = vmul.f32 %v609, %v457
      %v614 = vmul.f32 %v610, %v458
      %v615 = vmul.f32 %v611, %v459
      %v616 = vadd.f32 %v604, %v612
      %v617 = vadd.f32 %v605, %v613
      %v618 = vadd.f32 %v606, %v614
      %v619 = vadd.f32 %v607, %v615
      %v620 = vmul.f32 %v84, 0.8333334
      %v621 = vmul.f32 %v85, 0.8333334
      %v622 = vmul.f32 %v86, 0.8333334
      %v623 = vmul.f32 %v87, 0.8333334
      %v624 = vmul.f32 %v620, %v456
      %v625 = vmul.f32 %v621, %v457
      %v626 = vmul.f32 %v622, %v458
      %v627 = vmul.f32 %v623, %v459
      %v628 = vmul.f32 %v100, -0.8333333
      %v629 = vmul.f32 %v101, -0.8333333
      %v630 = vmul.f32 %v102, -0.8333333
      %v631 = vmul.f32 %v103, -0.8333333
      %v632 = vmul.f32 %v628, %v476
      %v633 = vmul.f32 %v629, %v477
      %v634 = vmul.f32 %v630, %v478
      %v635 = vmul.f32 %v631, %v479
      %v636 = vadd.f32 %v624, %v632
      %v637 = vadd.f32 %v625, %v633
      %v638 = vadd.f32 %v626, %v634
      %v639 = vadd.f32 %v627, %v635
      %v640 = vmul.f32 %v88, 0.8333333
      %v641 = vmul.f32 %v89, 0.8333333
      %v642 = vmul.f32 %v90, 0.8333333
      %v643 = vmul.f32 %v91, 0.8333333
      %v644 = vmul.f32 %v640, %v476
      %v645 = vmul.f32 %v641, %v477
      %v646 = vmul.f32 %v642, %v478
      %v647 = vmul.f32 %v643, %v479
      %v648 = vmul.f32 %v104, -0.8333333
      %v649 = vmul.f32 %v105, -0.8333333
      %v650 = vmul.f32 %v106, -0.8333333
      %v651 = vmul.f32 %v107, -0.8333333
      %v652 = vmul.f32 %v648, %v496
      %v653 = vmul.f32 %v649, %v497
      %v654 = vmul.f32 %v650, %v498
      %v655 = vmul.f32 %v651, %v499
      %v656 = vadd.f32 %v644, %v652
      %v657 = vadd.f32 %v645, %v653
      %v658 = vadd.f32 %v646, %v654
      %v659 = vadd.f32 %v647, %v655
      %v660 = vmul.f32 %v92, 0.8333333
      %v661 = vmul.f32 %v93, 0.8333333
      %v662 = vmul.f32 %v94, 0.8333333
      %v663 = vmul.f32 %v95, 0.8333333
      %v664 = vmul.f32 %v660, %v496
      %v665 = vmul.f32 %v661, %v497
      %v666 = vmul.f32 %v662, %v498
      %v667 = vmul.f32 %v663, %v499
      %v668 = vmul.f32 %v108, -0.8333333
      %v669 = vmul.f32 %v109, -0.8333333
      %v670 = vmul.f32 %v110, -0.8333333
      %v671 = vmul.f32 %v111, -0.8333333
      %v672 = vmul.f32 %v668, %v516
      %v673 = vmul.f32 %v669, %v517
      %v674 = vmul.f32 %v670, %v518
      %v675 = vmul.f32 %v671, %v519
      %v676 = vadd.f32 %v664, %v672
      %v677 = vadd.f32 %v665, %v673
      %v678 = vadd.f32 %v666, %v674
      %v679 = vadd.f32 %v667, %v675
      %v680 = vmul.f32 %v96, 0.8333333
      %v681 = vmul.f32 %v97, 0.8333333
      %v682 = vmul.f32 %v98, 0.8333333
      %v683 = vmul.f32 %v99, 0.8333333
      %v684 = vmul.f32 %v680, %v516
      %v685 = vmul.f32 %v681, %v517
      %v686 = vmul.f32 %v682, %v518
      %v687 = vmul.f32 %v683, %v519
      %v688 = vmul.f32 %v112, -0.8333333
      %v689 = vmul.f32 %v113, -0.8333333
      %v690 = vmul.f32 %v114, -0.8333333
      %v691 = vmul.f32 %v115, -0.8333333
      %v692 = vmul.f32 %v688, %v536
      %v693 = vmul.f32 %v689, %v537
      %v694 = vmul.f32 %v690, %v538
      %v695 = vmul.f32 %v691, %v539
      %v696 = vadd.f32 %v684, %v692
      %v697 = vadd.f32 %v685, %v693
      %v698 = vadd.f32 %v686, %v694
      %v699 = vadd.f32 %v687, %v695
      %v700 = vmul.f32 %v100, 0.8333333
      %v701 = vmul.f32 %v101, 0.8333333
      %v702 = vmul.f32 %v102, 0.8333333
      %v703 = vmul.f32 %v103, 0.8333333
      %v704 = vmul.f32 %v700, %v536
      %v705 = vmul.f32 %v701, %v537
      %v706 = vmul.f32 %v702, %v538
      %v707 = vmul.f32 %v703, %v539
      %v708 = vmul.f32 %v116, -0.8333333
      %v709 = vmul.f32 %v117, -0.8333333
      %v710 = vmul.f32 %v118, -0.8333333
      %v711 = vmul.f32 %v119, -0.8333333
      %v712 = vmul.f32 %v708, %v556
      %v713 = vmul.f32 %v709, %v557
      %v714 = vmul.f32 %v710, %v558
      %v715 = vmul.f32 %v711, %v559
      %v716 = vadd.f32 %v704, %v712
      %v717 = vadd.f32 %v705, %v713
      %v718 = vadd.f32 %v706, %v714
      %v719 = vadd.f32 %v707, %v715
      %v720 = vmul.f32 %v104, 0.8333333
      %v721 = vmul.f32 %v105, 0.8333333
      %v722 = vmul.f32 %v106, 0.8333333
      %v723 = vmul.f32 %v107, 0.8333333
      %v724 = vmul.f32 %v720, %v556
      %v725 = vmul.f32 %v721, %v557
      %v726 = vmul.f32 %v722, %v558
      %v727 = vmul.f32 %v723, %v559
      %v728 = vmul.f32 %v120, -0.8333334
      %v729 = vmul.f32 %v121, -0.8333334
      %v730 = vmul.f32 %v122, -0.8333334
      %v731 = vmul.f32 %v123, -0.8333334
      %v732 = vmul.f32 %v728, %v576
      %v733 = vmul.f32 %v729, %v577
      %v734 = vmul.f32 %v730, %v578
      %v735 = vmul.f32 %v731, %v579
      %v736 = vadd.f32 %v724, %v732
      %v737 = vadd.f32 %v725, %v733
      %v738 = vadd.f32 %v726, %v734
      %v739 = vadd.f32 %v727, %v735
      %v740 = vmul.f32 %v108, 0.8333334
      %v741 = vmul.f32 %v109, 0.8333334
      %v742 = vmul.f32 %v110, 0.8333334
      %v743 = vmul.f32 %v111, 0.8333334
      %v744 = vmul.f32 %v740, %v576
      %v745 = vmul.f32 %v741, %v577
      %v746 = vmul.f32 %v742, %v578
      %v747 = vmul.f32 %v743, %v579
      %v748 = vmul.f32 %v124, -0.8333333
      %v749 = vmul.f32 %v125, -0.8333333
      %v750 = vmul.f32 %v126, -0.8333333
      %v751 = vmul.f32 %v127, -0.8333333
      %v752 = vmul.f32 %v748, %v596
      %v753 = vmul.f32 %v749, %v597
      %v754 = vmul.f32 %v750, %v598
      %v755 = vmul.f32 %v751, %v599
      %v756 = vadd.f32 %v744, %v752
      %v757 = vadd.f32 %v745, %v753
      %v758 = vadd.f32 %v746, %v754
      %v759 = vadd.f32 %v747, %v755
      %760 = vst [vmem:[#allocation2 + $0x20] sm:$0xff] %v616
      %761 = vst [vmem:[#allocation2 + $0x28] sm:$0xff] %v617
      %762 = vst [vmem:[#allocation2 + $0x30] sm:$0xff] %v618
      %763 = vst [vmem:[#allocation2 + $0x38] sm:$0xff] %v619
      %764 = vst [vmem:[#allocation2 + $0x40] sm:$0xff] %v636
      %765 = vst [vmem:[#allocation2 + $0x48] sm:$0xff] %v637
      %766 = vst [vmem:[#allocation2 + $0x50] sm:$0xff] %v638
      %767 = vst [vmem:[#allocation2 + $0x58] sm:$0xff] %v639
      %768 = vst [vmem:[#allocation2 + $0x60] sm:$0xff] %v656
      %769 = vst [vmem:[#allocation2 + $0x68] sm:$0xff] %v657
      %770 = vst [vmem:[#allocation2 + $0x70] sm:$0xff] %v658
      %771 = vst [vmem:[#allocation2 + $0x78] sm:$0xff] %v659
      %772 = vst [vmem:[#allocation2 + $0x80] sm:$0xff] %v676
      %773 = vst [vmem:[#allocation2 + $0x88] sm:$0xff] %v677
      %774 = vst [vmem:[#allocation2 + $0x90] sm:$0xff] %v678
      %775 = vst [vmem:[#allocation2 + $0x98] sm:$0xff] %v679
      %776 = vst [vmem:[#allocation2 + $0xa0] sm:$0xff] %v696
      %777 = vst [vmem:[#allocation2 + $0xa8] sm:$0xff] %v697
      %778 = vst [vmem:[#allocation2 + $0xb0] sm:$0xff] %v698
      %779 = vst [vmem:[#allocation2 + $0xb8] sm:$0xff] %v699
      %780 = vst [vmem:[#allocation2 + $0xc0] sm:$0xff] %v716
      %781 = vst [vmem:[#allocation2 + $0xc8] sm:$0xff] %v717
      %782 = vst [vmem:[#allocation2 + $0xd0] sm:$0xff] %v718
      %783 = vst [vmem:[#allocation2 + $0xd8] sm:$0xff] %v719
      %784 = vst [vmem:[#allocation2 + $0xe0] sm:$0xff] %v736
      %785 = vst [vmem:[#allocation2 + $0xe8] sm:$0xff] %v737
      %786 = vst [vmem:[#allocation2 + $0xf0] sm:$0xff] %v738
      %787 = vst [vmem:[#allocation2 + $0xf8] sm:$0xff] %v739
      %788 = vst [vmem:[#allocation2 + $0x100] sm:$0xff] %v756
      %789 = vst [vmem:[#allocation2 + $0x108] sm:$0xff] %v757
      %790 = vst [vmem:[#allocation2 + $0x110] sm:$0xff] %v758
      %791 = vst [vmem:[#allocation2 + $0x118] sm:$0xff] %v759
    $region21: #{tpu_custom_call.1} parent=1 // pred_fallthru
      _
    %v792 = vld [vmem:[#allocation2] sm:$0xff]
    %v793 = vld [vmem:[#allocation2 + $0x8] sm:$0xff]
    %v794 = vld [vmem:[#allocation2 + $0x10] sm:$0xff]
    %v795 = vld [vmem:[#allocation2 + $0x18] sm:$0xff]
    %v796 = vld [vmem:[#allocation2 + $0x20] sm:$0xff]
    %v797 = vld [vmem:[#allocation2 + $0x28] sm:$0xff]
    %v798 = vld [vmem:[#allocation2 + $0x30] sm:$0xff]
    %v799 = vld [vmem:[#allocation2 + $0x38] sm:$0xff]
    %v800 = vld [vmem:[#allocation2 + $0x40] sm:$0xff]
    %v801 = vld [vmem:[#allocation2 + $0x48] sm:$0xff]
    %v802 = vld [vmem:[#allocation2 + $0x50] sm:$0xff]
    %v803 = vld [vmem:[#allocation2 + $0x58] sm:$0xff]
    %v804 = vld [vmem:[#allocation2 + $0x60] sm:$0xff]
    %v805 = vld [vmem:[#allocation2 + $0x68] sm:$0xff]
    %v806 = vld [vmem:[#allocation2 + $0x70] sm:$0xff]
    %v807 = vld [vmem:[#allocation2 + $0x78] sm:$0xff]
    %v808 = vld [vmem:[#allocation2 + $0x80] sm:$0xff]
    %v809 = vld [vmem:[#allocation2 + $0x88] sm:$0xff]
    %v810 = vld [vmem:[#allocation2 + $0x90] sm:$0xff]
    %v811 = vld [vmem:[#allocation2 + $0x98] sm:$0xff]
    %v812 = vld [vmem:[#allocation2 + $0xa0] sm:$0xff]
    %v813 = vld [vmem:[#allocation2 + $0xa8] sm:$0xff]
    %v814 = vld [vmem:[#allocation2 + $0xb0] sm:$0xff]
    %v815 = vld [vmem:[#allocation2 + $0xb8] sm:$0xff]
    %v816 = vld [vmem:[#allocation2 + $0xc0] sm:$0xff]
    %v817 = vld [vmem:[#allocation2 + $0xc8] sm:$0xff]
    %v818 = vld [vmem:[#allocation2 + $0xd0] sm:$0xff]
    %v819 = vld [vmem:[#allocation2 + $0xd8] sm:$0xff]
    %v820 = vld [vmem:[#allocation2 + $0xe0] sm:$0xff]
    %v821 = vld [vmem:[#allocation2 + $0xe8] sm:$0xff]
    %v822 = vld [vmem:[#allocation2 + $0xf0] sm:$0xff]
    %v823 = vld [vmem:[#allocation2 + $0xf8] sm:$0xff]
    %v824 = vld [vmem:[#allocation2 + $0x100] sm:$0xff]
    %v825 = vld [vmem:[#allocation2 + $0x108] sm:$0xff]
    %v826 = vld [vmem:[#allocation2 + $0x110] sm:$0xff]
    %v827 = vld [vmem:[#allocation2 + $0x118] sm:$0xff]
    %v828 = vld [vmem:[#allocation6] sm:$0xff]
    %v829 = vld [vmem:[#allocation6 + $0x8] sm:$0xff]
    %v830 = vld [vmem:[#allocation6 + $0x10] sm:$0xff]
    %v831 = vld [vmem:[#allocation6 + $0x18] sm:$0xff]
    %v832 = vld [vmem:[#allocation6 + $0x20] sm:$0xff]
    %v833 = vld [vmem:[#allocation6 + $0x28] sm:$0xff]
    %v834 = vld [vmem:[#allocation6 + $0x30] sm:$0xff]
    %v835 = vld [vmem:[#allocation6 + $0x38] sm:$0xff]
    %v836 = vld [vmem:[#allocation6 + $0x40] sm:$0xff]
    %v837 = vld [vmem:[#allocation6 + $0x48] sm:$0xff]
    %v838 = vld [vmem:[#allocation6 + $0x50] sm:$0xff]
    %v839 = vld [vmem:[#allocation6 + $0x58] sm:$0xff]
    %v840 = vld [vmem:[#allocation6 + $0x60] sm:$0xff]
    %v841 = vld [vmem:[#allocation6 + $0x68] sm:$0xff]
    %v842 = vld [vmem:[#allocation6 + $0x70] sm:$0xff]
    %v843 = vld [vmem:[#allocation6 + $0x78] sm:$0xff]
    %v844 = vld [vmem:[#allocation6 + $0x80] sm:$0xff]
    %v845 = vld [vmem:[#allocation6 + $0x88] sm:$0xff]
    %v846 = vld [vmem:[#allocation6 + $0x90] sm:$0xff]
    %v847 = vld [vmem:[#allocation6 + $0x98] sm:$0xff]
    %v848 = vld [vmem:[#allocation6 + $0xa0] sm:$0xff]
    %v849 = vld [vmem:[#allocation6 + $0xa8] sm:$0xff]
    %v850 = vld [vmem:[#allocation6 + $0xb0] sm:$0xff]
    %v851 = vld [vmem:[#allocation6 + $0xb8] sm:$0xff]
    %v852 = vld [vmem:[#allocation6 + $0xc0] sm:$0xff]
    %v853 = vld [vmem:[#allocation6 + $0xc8] sm:$0xff]
    %v854 = vld [vmem:[#allocation6 + $0xd0] sm:$0xff]
    %v855 = vld [vmem:[#allocation6 + $0xd8] sm:$0xff]
    %v856 = vld [vmem:[#allocation6 + $0xe0] sm:$0xff]
    %v857 = vld [vmem:[#allocation6 + $0xe8] sm:$0xff]
    %v858 = vld [vmem:[#allocation6 + $0xf0] sm:$0xff]
    %v859 = vld [vmem:[#allocation6 + $0xf8] sm:$0xff]
    %v860 = vld [vmem:[#allocation6 + $0x100] sm:$0xff]
    %v861 = vld [vmem:[#allocation6 + $0x108] sm:$0xff]
    %v862 = vld [vmem:[#allocation6 + $0x110] sm:$0xff]
    %v863 = vld [vmem:[#allocation6 + $0x118] sm:$0xff]
    %864 = vxpose.xlu0.b32.start [1/16] %v792, 128
    %865 = vxpose.xlu0.b32.cont [2/16] %v793, 128
    %866 = vxpose.xlu0.b32.cont [3/16] %v794, 128
    %867 = vxpose.xlu0.b32.cont [4/16] %v795, 128
    %868 = vxpose.xlu0.b32.cont [5/16] %v796, 128
    %869 = vxpose.xlu0.b32.cont [6/16] %v797, 128
    %870 = vxpose.xlu0.b32.cont [7/16] %v798, 128
    %871 = vxpose.xlu0.b32.cont [8/16] %v799, 128
    %872 = vxpose.xlu0.b32.cont [9/16] %v800, 128
    %873 = vxpose.xlu0.b32.cont [10/16] %v801, 128
    %874 = vxpose.xlu0.b32.cont [11/16] %v802, 128
    %875 = vxpose.xlu0.b32.cont [12/16] %v803, 128
    %876 = vxpose.xlu0.b32.cont [13/16] %v804, 128
    %877 = vxpose.xlu0.b32.cont [14/16] %v805, 128
    %878 = vxpose.xlu0.b32.cont [15/16] %v806, 128
    %879 = vxpose.xlu0.b32.end [16/16] %v807, 128
    %v880 = vpop.trf.xlu0
    %v881 = vpop.trf.xlu0
    %v882 = vpop.trf.xlu0
    %v883 = vpop.trf.xlu0
    %v884 = vpop.trf.xlu0
    %v885 = vpop.trf.xlu0
    %v886 = vpop.trf.xlu0
    %v887 = vpop.trf.xlu0
    %v888 = vpop.trf.xlu0
    %v889 = vpop.trf.xlu0
    %v890 = vpop.trf.xlu0
    %v891 = vpop.trf.xlu0
    %v892 = vpop.trf.xlu0
    %v893 = vpop.trf.xlu0
    %v894 = vpop.trf.xlu0
    %v895 = vpop.trf.xlu0
    %896 = vxpose.xlu0.b32.start [1/16] %v808, 128
    %897 = vxpose.xlu0.b32.cont [2/16] %v809, 128
    %898 = vxpose.xlu0.b32.cont [3/16] %v810, 128
    %899 = vxpose.xlu0.b32.cont [4/16] %v811, 128
    %900 = vxpose.xlu0.b32.cont [5/16] %v812, 128
    %901 = vxpose.xlu0.b32.cont [6/16] %v813, 128
    %902 = vxpose.xlu0.b32.cont [7/16] %v814, 128
    %903 = vxpose.xlu0.b32.cont [8/16] %v815, 128
    %904 = vxpose.xlu0.b32.cont [9/16] %v816, 128
    %905 = vxpose.xlu0.b32.cont [10/16] %v817, 128
    %906 = vxpose.xlu0.b32.cont [11/16] %v818, 128
    %907 = vxpose.xlu0.b32.cont [12/16] %v819, 128
    %908 = vxpose.xlu0.b32.cont [13/16] %v820, 128
    %909 = vxpose.xlu0.b32.cont [14/16] %v821, 128
    %910 = vxpose.xlu0.b32.cont [15/16] %v822, 128
    %911 = vxpose.xlu0.b32.end [16/16] %v823, 128
    %v912 = vpop.trf.xlu0
    %v913 = vpop.trf.xlu0
    %v914 = vpop.trf.xlu0
    %v915 = vpop.trf.xlu0
    %v916 = vpop.trf.xlu0
    %v917 = vpop.trf.xlu0
    %v918 = vpop.trf.xlu0
    %v919 = vpop.trf.xlu0
    %v920 = vpop.trf.xlu0
    %v921 = vpop.trf.xlu0
    %v922 = vpop.trf.xlu0
    %v923 = vpop.trf.xlu0
    %v924 = vpop.trf.xlu0
    %v925 = vpop.trf.xlu0
    %v926 = vpop.trf.xlu0
    %v927 = vpop.trf.xlu0
    %928 = vxpose.xlu0.b32.start [1/16] %v824, 128
    %929 = vxpose.xlu0.b32.cont [2/16] %v825, 128
    %930 = vxpose.xlu0.b32.cont [3/16] %v826, 128
    %931 = vxpose.xlu0.b32.cont [4/16] %v827, 128
    %932 = vxpose.xlu0.b32.cont [5/16] 0.0, 128
    %933 = vxpose.xlu0.b32.cont [6/16] 0.0, 128
    %934 = vxpose.xlu0.b32.cont [7/16] 0.0, 128
    %935 = vxpose.xlu0.b32.cont [8/16] 0.0, 128
    %936 = vxpose.xlu0.b32.cont [9/16] 0.0, 128
    %937 = vxpose.xlu0.b32.cont [10/16] 0.0, 128
    %938 = vxpose.xlu0.b32.cont [11/16] 0.0, 128
    %939 = vxpose.xlu0.b32.cont [12/16] 0.0, 128
    %940 = vxpose.xlu0.b32.cont [13/16] 0.0, 128
    %941 = vxpose.xlu0.b32.cont [14/16] 0.0, 128
    %942 = vxpose.xlu0.b32.cont [15/16] 0.0, 128
    %943 = vxpose.xlu0.b32.end [16/16] 0.0, 128
    %v944 = vpop.trf.xlu0
    %v945 = vpop.trf.xlu0
    %v946 = vpop.trf.xlu0
    %v947 = vpop.trf.xlu0
    %v948 = vpop.trf.xlu0
    %v949 = vpop.trf.xlu0
    %v950 = vpop.trf.xlu0
    %v951 = vpop.trf.xlu0
    %v952 = vpop.trf.xlu0
    %v953 = vpop.trf.xlu0
    %v954 = vpop.trf.xlu0
    %v955 = vpop.trf.xlu0
    %v956 = vpop.trf.xlu0
    %v957 = vpop.trf.xlu0
    %v958 = vpop.trf.xlu0
    %v959 = vpop.trf.xlu0
    %vm960 = vcmask 261120
    %v962 = vsel %vm960, %v944, 0
    %v965 = vsel %vm960, %v945, 0
    %v968 = vsel %vm960, %v946, 0
    %v971 = vsel %vm960, %v947, 0
    %v974 = vsel %vm960, %v948, 0
    %v977 = vsel %vm960, %v949, 0
    %v980 = vsel %vm960, %v950, 0
    %v983 = vsel %vm960, %v951, 0
    %v986 = vsel %vm960, %v952, 0
    %v989 = vsel %vm960, %v953, 0
    %v992 = vsel %vm960, %v954, 0
    %v995 = vsel %vm960, %v955, 0
    %v998 = vsel %vm960, %v956, 0
    %v1001 = vsel %vm960, %v957, 0
    %v1004 = vsel %vm960, %v958, 0
    %v1007 = vsel %vm960, %v959, 0
    %1009 = vmatprep.subr.mxu0 0.0
    %1010 = vmatpush1.msra.mxu0 %v828
    %1011 = vmatprep.subr.mxu0 0.0
    %1012 = vmatpush1.msra.mxu0 %v829
    %1013 = vmatprep.subr.mxu0 0.0
    %1014 = vmatpush1.msra.mxu0 %v830
    %1015 = vmatprep.subr.mxu0 0.0
    %1016 = vmatpush1.msra.mxu0 %v831
    %1017 = vmatprep.subr.mxu0 0.0
    %1018 = vmatpush1.msra.mxu0 %v832
    %1019 = vmatprep.subr.mxu0 0.0
    %1020 = vmatpush1.msra.mxu0 %v833
    %1021 = vmatprep.subr.mxu0 0.0
    %1022 = vmatpush1.msra.mxu0 %v834
    %1023 = vmatprep.subr.mxu0 0.0
    %1024 = vmatpush1.msra.mxu0 %v835
    %1025 = vmatprep.subr.mxu0 0.0
    %1026 = vmatpush1.msra.mxu0 %v836
    %1027 = vmatprep.subr.mxu0 0.0
    %1028 = vmatpush1.msra.mxu0 %v837
    %1029 = vmatprep.subr.mxu0 0.0
    %1030 = vmatpush1.msra.mxu0 %v838
    %1031 = vmatprep.subr.mxu0 0.0
    %1032 = vmatpush1.msra.mxu0 %v839
    %1033 = vmatprep.subr.mxu0 0.0
    %1034 = vmatpush1.msra.mxu0 %v840
    %1035 = vmatprep.subr.mxu0 0.0
    %1036 = vmatpush1.msra.mxu0 %v841
    %1037 = vmatprep.subr.mxu0 0.0
    %1038 = vmatpush1.msra.mxu0 %v842
    %1039 = vmatprep.subr.mxu0 0.0
    %1040 = vmatpush1.msra.mxu0 %v843
    %1041 = vmatprep.subr.mxu0 0.0
    %1042 = vmatpush1.msra.mxu0 %v844
    %1043 = vmatprep.subr.mxu0 0.0
    %1044 = vmatpush1.msra.mxu0 %v845
    %1045 = vmatprep.subr.mxu0 0.0
    %1046 = vmatpush1.msra.mxu0 %v846
    %1047 = vmatprep.subr.mxu0 0.0
    %1048 = vmatpush1.msra.mxu0 %v847
    %1049 = vmatprep.subr.mxu0 0.0
    %1050 = vmatpush1.msra.mxu0 %v848
    %1051 = vmatprep.subr.mxu0 0.0
    %1052 = vmatpush1.msra.mxu0 %v849
    %1053 = vmatprep.subr.mxu0 0.0
    %1054 = vmatpush1.msra.mxu0 %v850
    %1055 = vmatprep.subr.mxu0 0.0
    %1056 = vmatpush1.msra.mxu0 %v851
    %1057 = vmatprep.subr.mxu0 0.0
    %1058 = vmatpush1.msra.mxu0 %v852
    %1059 = vmatprep.subr.mxu0 0.0
    %1060 = vmatpush1.msra.mxu0 %v853
    %1061 = vmatprep.subr.mxu0 0.0
    %1062 = vmatpush1.msra.mxu0 %v854
    %1063 = vmatprep.subr.mxu0 0.0
    %1064 = vmatpush1.msra.mxu0 %v855
    %1065 = vmatprep.subr.mxu0 0.0
    %1066 = vmatpush1.msra.mxu0 %v856
    %1067 = vmatprep.subr.mxu0 0.0
    %1068 = vmatpush1.msra.mxu0 %v857
    %1069 = vmatprep.subr.mxu0 0.0
    %1070 = vmatpush1.msra.mxu0 %v858
    %1071 = vmatprep.subr.mxu0 0.0
    %1072 = vmatpush1.msra.mxu0 %v859
    %1073 = vmatprep.mubr.f32.mxu0 %v912
    %1074 = vmatmul.mubr.f32.gmra.mrb[0].mxu0 %v880
    %v1075 = vpop.f32.mrb[0].mxu0
    %v1076 = vadd.f32 0.0, %v1075
    %v1077 = vpop.f32.mrb[0].mxu0
    %1078 = vmatprep.mubr.f32.mxu0 %v913
    %1079 = vmatmul.mubr.f32.gmra.mrb[0].mxu0 %v881
    %v1080 = vpop.f32.mrb[0].mxu0
    %v1081 = vadd.f32 0.0, %v1080
    %v1082 = vpop.f32.mrb[0].mxu0
    %1083 = vmatprep.mubr.f32.mxu0 %v914
    %1084 = vmatmul.mubr.f32.gmra.mrb[0].mxu0 %v882
    %v1085 = vpop.f32.mrb[0].mxu0
    %v1086 = vadd.f32 0.0, %v1085
    %v1087 = vpop.f32.mrb[0].mxu0
    %1088 = vmatprep.mubr.f32.mxu0 %v915
    %1089 = vmatmul.mubr.f32.gmra.mrb[0].mxu0 %v883
    %v1090 = vpop.f32.mrb[0].mxu0
    %v1091 = vadd.f32 0.0, %v1090
    %v1092 = vpop.f32.mrb[0].mxu0
    %1093 = vmatprep.mubr.f32.mxu0 %v916
    %1094 = vmatmul.mubr.f32.gmra.mrb[0].mxu0 %v884
    %v1095 = vpop.f32.mrb[0].mxu0
    %v1096 = vadd.f32 0.0, %v1095
    %v1097 = vpop.f32.mrb[0].mxu0
    %1098 = vmatprep.mubr.f32.mxu0 %v917
    %1099 = vmatmul.mubr.f32.gmra.mrb[0].mxu0 %v885
    %v1100 = vpop.f32.mrb[0].mxu0
    %v1101 = vadd.f32 0.0, %v1100
    %v1102 = vpop.f32.mrb[0].mxu0
    %1103 = vmatprep.mubr.f32.mxu0 %v918
    %1104 = vmatmul.mubr.f32.gmra.mrb[0].mxu0 %v886
    %v1105 = vpop.f32.mrb[0].mxu0
    %v1106 = vadd.f32 0.0, %v1105
    %v1107 = vpop.f32.mrb[0].mxu0
    %1108 = vmatprep.mubr.f32.mxu0 %v919
    %1109 = vmatmul.mubr.f32.gmra.mrb[0].mxu0 %v887
    %v1110 = vpop.f32.mrb[0].mxu0
    %v1111 = vadd.f32 0.0, %v1110
    %v1112 = vpop.f32.mrb[0].mxu0
    %1113 = vmatprep.mubr.f32.mxu0 %v920
    %1114 = vmatmul.mubr.f32.gmra.mrb[0].mxu0 %v888
    %v1115 = vpop.f32.mrb[0].mxu0
    %v1116 = vadd.f32 0.0, %v1115
    %v1117 = vpop.f32.mrb[0].mxu0
    %1118 = vmatprep.mubr.f32.mxu0 %v921
    %1119 = vmatmul.mubr.f32.gmra.mrb[0].mxu0 %v889
    %v1120 = vpop.f32.mrb[0].mxu0
    %v1121 = vadd.f32 0.0, %v1120
    %v1122 = vpop.f32.mrb[0].mxu0
    %1123 = vmatprep.mubr.f32.mxu0 %v922
    %1124 = vmatmul.mubr.f32.gmra.mrb[0].mxu0 %v890
    %v1125 = vpop.f32.mrb[0].mxu0
    %v1126 = vadd.f32 0.0, %v1125
    %v1127 = vpop.f32.mrb[0].mxu0
    %1128 = vmatprep.mubr.f32.mxu0 %v923
    %1129 = vmatmul.mubr.f32.gmra.mrb[0].mxu0 %v891
    %v1130 = vpop.f32.mrb[0].mxu0
    %v1131 = vadd.f32 0.0, %v1130
    %v1132 = vpop.f32.mrb[0].mxu0
    %1133 = vmatprep.mubr.f32.mxu0 %v924
    %1134 = vmatmul.mubr.f32.gmra.mrb[0].mxu0 %v892
    %v1135 = vpop.f32.mrb[0].mxu0
    %v1136 = vadd.f32 0.0, %v1135
    %v1137 = vpop.f32.mrb[0].mxu0
    %1138 = vmatprep.mubr.f32.mxu0 %v925
    %1139 = vmatmul.mubr.f32.gmra.mrb[0].mxu0 %v893
    %v1140 = vpop.f32.mrb[0].mxu0
    %v1141 = vadd.f32 0.0, %v1140
    %v1142 = vpop.f32.mrb[0].mxu0
    %1143 = vmatprep.mubr.f32.mxu0 %v926
    %1144 = vmatmul.mubr.f32.gmra.mrb[0].mxu0 %v894
    %v1145 = vpop.f32.mrb[0].mxu0
    %v1146 = vadd.f32 0.0, %v1145
    %v1147 = vpop.f32.mrb[0].mxu0
    %1148 = vmatprep.mubr.f32.mxu0 %v927
    %1149 = vmatmul.mubr.f32.gmra.mrb[0].mxu0 %v895
    %v1150 = vpop.f32.mrb[0].mxu0
    %v1151 = vadd.f32 0.0, %v1150
    %v1152 = vpop.f32.mrb[0].mxu0
    %1153 = vdwg.mxu0
    %1154 = vmatprep.subr.mxu0 0.0
    %1155 = vmatpush1.msra.mxu0 %v860
    %1156 = vmatprep.subr.mxu0 0.0
    %1157 = vmatpush1.msra.mxu0 %v861
    %1158 = vmatprep.subr.mxu0 0.0
    %1159 = vmatpush1.msra.mxu0 %v862
    %1160 = vmatprep.subr.mxu0 0.0
    %1161 = vmatpush1.msra.mxu0 %v863
    %1162 = vmatprep.subr.mxu0 0.0
    %1163 = vmatpush1.msra.mxu0 0.0
    %1164 = vmatprep.subr.mxu0 0.0
    %1165 = vmatpush1.msra.mxu0 0.0
    %1166 = vmatprep.subr.mxu0 0.0
    %1167 = vmatpush1.msra.mxu0 0.0
    %1168 = vmatprep.subr.mxu0 0.0
    %1169 = vmatpush1.msra.mxu0 0.0
    %1170 = vmatprep.subr.mxu0 0.0
    %1171 = vmatpush1.msra.mxu0 0.0
    %1172 = vmatprep.subr.mxu0 0.0
    %1173 = vmatpush1.msra.mxu0 0.0
    %1174 = vmatprep.subr.mxu0 0.0
    %1175 = vmatpush1.msra.mxu0 0.0
    %1176 = vmatprep.subr.mxu0 0.0
    %1177 = vmatpush1.msra.mxu0 0.0
    %1178 = vmatprep.subr.mxu0 0.0
    %1179 = vmatpush1.msra.mxu0 0.0
    %1180 = vmatprep.subr.mxu0 0.0
    %1181 = vmatpush1.msra.mxu0 0.0
    %1182 = vmatprep.subr.mxu0 0.0
    %1183 = vmatpush1.msra.mxu0 0.0
    %1184 = vmatprep.subr.mxu0 0.0
    %1185 = vmatpush1.msra.mxu0 0.0
    %1186 = vmatprep.subr.mxu0 0.0
    %1187 = vmatpush1.msra.mxu0 0.0
    %1188 = vmatprep.subr.mxu0 0.0
    %1189 = vmatpush1.msra.mxu0 0.0
    %1190 = vmatprep.subr.mxu0 0.0
    %1191 = vmatpush1.msra.mxu0 0.0
    %1192 = vmatprep.subr.mxu0 0.0
    %1193 = vmatpush1.msra.mxu0 0.0
    %1194 = vmatprep.subr.mxu0 0.0
    %1195 = vmatpush1.msra.mxu0 0.0
    %1196 = vmatprep.subr.mxu0 0.0
    %1197 = vmatpush1.msra.mxu0 0.0
    %1198 = vmatprep.subr.mxu0 0.0
    %1199 = vmatpush1.msra.mxu0 0.0
    %1200 = vmatprep.subr.mxu0 0.0
    %1201 = vmatpush1.msra.mxu0 0.0
    %1202 = vmatprep.subr.mxu0 0.0
    %1203 = vmatpush1.msra.mxu0 0.0
    %1204 = vmatprep.subr.mxu0 0.0
    %1205 = vmatpush1.msra.mxu0 0.0
    %1206 = vmatprep.subr.mxu0 0.0
    %1207 = vmatpush1.msra.mxu0 0.0
    %1208 = vmatprep.subr.mxu0 0.0
    %1209 = vmatpush1.msra.mxu0 0.0
    %1210 = vmatprep.subr.mxu0 0.0
    %1211 = vmatpush1.msra.mxu0 0.0
    %1212 = vmatprep.subr.mxu0 0.0
    %1213 = vmatpush1.msra.mxu0 0.0
    %1214 = vmatprep.subr.mxu0 0.0
    %1215 = vmatpush1.msra.mxu0 0.0
    %1216 = vmatprep.subr.mxu0 0.0
    %1217 = vmatpush1.msra.mxu0 0.0
    %1218 = vmatprep.mubr.f32.mxu0 0.0
    %1219 = vmatmul.mubr.f32.gmra.mrb[0].mxu0 %v962
    %v1220 = vpop.f32.mrb[0].mxu0
    %v1221 = vadd.f32 %v1076, %v1220
    %v1222 = vpop.f32.mrb[0].mxu0
    %1223 = vmatprep.mubr.f32.mxu0 0.0
    %1224 = vmatmul.mubr.f32.gmra.mrb[0].mxu0 %v965
    %v1225 = vpop.f32.mrb[0].mxu0
    %v1226 = vadd.f32 %v1081, %v1225
    %v1227 = vpop.f32.mrb[0].mxu0
    %1228 = vmatprep.mubr.f32.mxu0 0.0
    %1229 = vmatmul.mubr.f32.gmra.mrb[0].mxu0 %v968
    %v1230 = vpop.f32.mrb[0].mxu0
    %v1231 = vadd.f32 %v1086, %v1230
    %v1232 = vpop.f32.mrb[0].mxu0
    %1233 = vmatprep.mubr.f32.mxu0 0.0
    %1234 = vmatmul.mubr.f32.gmra.mrb[0].mxu0 %v971
    %v1235 = vpop.f32.mrb[0].mxu0
    %v1236 = vadd.f32 %v1091, %v1235
    %v1237 = vpop.f32.mrb[0].mxu0
    %1238 = vmatprep.mubr.f32.mxu0 0.0
    %1239 = vmatmul.mubr.f32.gmra.mrb[0].mxu0 %v974
    %v1240 = vpop.f32.mrb[0].mxu0
    %v1241 = vadd.f32 %v1096, %v1240
    %v1242 = vpop.f32.mrb[0].mxu0
    %1243 = vmatprep.mubr.f32.mxu0 0.0
    %1244 = vmatmul.mubr.f32.gmra.mrb[0].mxu0 %v977
    %v1245 = vpop.f32.mrb[0].mxu0
    %v1246 = vadd.f32 %v1101, %v1245
    %v1247 = vpop.f32.mrb[0].mxu0
    %1248 = vmatprep.mubr.f32.mxu0 0.0
    %1249 = vmatmul.mubr.f32.gmra.mrb[0].mxu0 %v980
    %v1250 = vpop.f32.mrb[0].mxu0
    %v1251 = vadd.f32 %v1106, %v1250
    %v1252 = vpop.f32.mrb[0].mxu0
    %1253 = vmatprep.mubr.f32.mxu0 0.0
    %1254 = vmatmul.mubr.f32.gmra.mrb[0].mxu0 %v983
    %v1255 = vpop.f32.mrb[0].mxu0
    %v1256 = vadd.f32 %v1111, %v1255
    %v1257 = vpop.f32.mrb[0].mxu0
    %1258 = vmatprep.mubr.f32.mxu0 0.0
    %1259 = vmatmul.mubr.f32.gmra.mrb[0].mxu0 %v986
    %v1260 = vpop.f32.mrb[0].mxu0
    %v1261 = vadd.f32 %v1116, %v1260
    %v1262 = vpop.f32.mrb[0].mxu0
    %1263 = vmatprep.mubr.f32.mxu0 0.0
    %1264 = vmatmul.mubr.f32.gmra.mrb[0].mxu0 %v989
    %v1265 = vpop.f32.mrb[0].mxu0
    %v1266 = vadd.f32 %v1121, %v1265
    %v1267 = vpop.f32.mrb[0].mxu0
    %1268 = vmatprep.mubr.f32.mxu0 0.0
    %1269 = vmatmul.mubr.f32.gmra.mrb[0].mxu0 %v992
    %v1270 = vpop.f32.mrb[0].mxu0
    %v1271 = vadd.f32 %v1126, %v1270
    %v1272 = vpop.f32.mrb[0].mxu0
    %1273 = vmatprep.mubr.f32.mxu0 0.0
    %1274 = vmatmul.mubr.f32.gmra.mrb[0].mxu0 %v995
    %v1275 = vpop.f32.mrb[0].mxu0
    %v1276 = vadd.f32 %v1131, %v1275
    %v1277 = vpop.f32.mrb[0].mxu0
    %1278 = vmatprep.mubr.f32.mxu0 0.0
    %1279 = vmatmul.mubr.f32.gmra.mrb[0].mxu0 %v998
    %v1280 = vpop.f32.mrb[0].mxu0
    %v1281 = vadd.f32 %v1136, %v1280
    %v1282 = vpop.f32.mrb[0].mxu0
    %1283 = vmatprep.mubr.f32.mxu0 0.0
    %1284 = vmatmul.mubr.f32.gmra.mrb[0].mxu0 %v1001
    %v1285 = vpop.f32.mrb[0].mxu0
    %v1286 = vadd.f32 %v1141, %v1285
    %v1287 = vpop.f32.mrb[0].mxu0
    %1288 = vmatprep.mubr.f32.mxu0 0.0
    %1289 = vmatmul.mubr.f32.gmra.mrb[0].mxu0 %v1004
    %v1290 = vpop.f32.mrb[0].mxu0
    %v1291 = vadd.f32 %v1146, %v1290
    %v1292 = vpop.f32.mrb[0].mxu0
    %1293 = vmatprep.mubr.f32.mxu0 0.0
    %1294 = vmatmul.mubr.f32.gmra.mrb[0].mxu0 %v1007
    %v1295 = vpop.f32.mrb[0].mxu0
    %v1296 = vadd.f32 %v1151, %v1295
    %v1297 = vpop.f32.mrb[0].mxu0
    %1298 = vdwg.mxu0
    %1299 = vst [vmem:[#allocation8] sm:$0xff] %v1221
    %1300 = vst [vmem:[#allocation8 + $0x8] sm:$0xff] %v1226
    %1301 = vst [vmem:[#allocation8 + $0x10] sm:$0xff] %v1231
    %1302 = vst [vmem:[#allocation8 + $0x18] sm:$0xff] %v1236
    %1303 = vst [vmem:[#allocation8 + $0x20] sm:$0xff] %v1241
    %1304 = vst [vmem:[#allocation8 + $0x28] sm:$0xff] %v1246
    %1305 = vst [vmem:[#allocation8 + $0x30] sm:$0xff] %v1251
    %1306 = vst [vmem:[#allocation8 + $0x38] sm:$0xff] %v1256
    %1307 = vst [vmem:[#allocation8 + $0x40] sm:$0xff] %v1261
    %1308 = vst [vmem:[#allocation8 + $0x48] sm:$0xff] %v1266
    %1309 = vst [vmem:[#allocation8 + $0x50] sm:$0xff] %v1271
    %1310 = vst [vmem:[#allocation8 + $0x58] sm:$0xff] %v1276
    %1311 = vst [vmem:[#allocation8 + $0x60] sm:$0xff] %v1281
    %1312 = vst [vmem:[#allocation8 + $0x68] sm:$0xff] %v1286
    %1313 = vst [vmem:[#allocation8 + $0x70] sm:$0xff] %v1291
    %1314 = vst [vmem:[#allocation8 + $0x78] sm:$0xff] %v1296
    // Predicated region
    $region22: #{tpu_custom_call.1} parent=1 // pred_check
      _
    $region23: #{tpu_custom_call.1} parent=1 // pred_check_branch
      %1316 = sbr.rel (0) target = $region25
    $region24: #{tpu_custom_call.1} parent=1 // pred_region
      %s1318 = ssub.s32 2048, 2048
      %1319 = vsyncadd [#allocation5], %s1318
      %s1320 = sshll.u32 [#allocation8], 4
      %s1321 = int_to_ptr.vmem [resolvable:$true] %s1320
      %1326 = dma.vmem_to_hbm [thread:$0]  %s1321, 2048, %s2, [#allocation5], 128, 128, 8
    $region25: #{tpu_custom_call.1} parent=1 // pred_fallthru
      _
    // Predicated region
    $region26: #{tpu_custom_call.1} parent=1 // pred_check
      _
    $region27: #{tpu_custom_call.1} parent=1 // pred_check_branch
      %1328 = sbr.rel (0) target = $region29
    $region28: #{tpu_custom_call.1} parent=1 // pred_region
      %1329 = dma.done [#allocation5], 2048
    $region29: #{tpu_custom_call.1} parent=1 // pred_fallthru
      _
    %1330 = vsyncpa [#allocation4], 1
    %1331 = vsyncpa [#allocation7], 1
    %1332 = vsyncpa [#allocation5], 1

</llo_original>
